<compile_context>
chip_gen: v7x
topology: tpu7x:2x2x1
jax: 0.10.0
libtpu: 0.0.40
codegen_flags: <defaults>
</compile_context>

<pallas_src>
import jax
import jax.numpy as jnp
from jax import lax
from jax.experimental import pallas as pl
from jax.experimental.pallas import tpu as pltpu


MATMUL_DTYPE = jnp.bfloat16   # MXU-native on v6e/v7x; set to jnp.float32 for exact-f32
TIME_BLOCK = 8                # LSTM time steps per grid iteration (unrolled in-kernel)


def _round_up(x, m):
    return ((x + m - 1) // m) * m


# ----------------------- tiled matmul + bias kernel -------------------------
def matmul_bias_kernel(x_ref, w_ref, b_ref, o_ref, acc_ref):
    # grid = (M/tm, N/tn, K/tk); acc persists across the k ("arbitrary") axis.
    @pl.when(pl.program_id(2) == 0)
    def _():
        acc_ref[...] = jnp.zeros_like(acc_ref)

    acc_ref[...] += jnp.dot(x_ref[...], w_ref[...],
                            preferred_element_type=jnp.float32)

    @pl.when(pl.program_id(2) == pl.num_programs(2) - 1)
    def _():
        o_ref[...] = (acc_ref[...] + b_ref[...]).astype(o_ref.dtype)


def matmul_bias(x, w, b, out_dtype, *, tm=256, tn=512, tk=512):
    """(M, K) @ (K, N) + (1, N) -> (M, N) as a tiled, double-buffered Pallas matmul."""
    M, K = x.shape
    _, N = w.shape
    tm = min(tm, _round_up(M, 8))
    tn = min(tn, _round_up(N, 128))   # tn<=512 keeps double-buffering alive on v7x 64MiB
    tk = min(tk, _round_up(K, 128))
    Mp, Kp, Np = _round_up(M, tm), _round_up(K, tk), _round_up(N, tn)
    if (Mp, Kp) != (M, K):
        x = jnp.pad(x, ((0, Mp - M), (0, Kp - K)))
    if (Kp, Np) != (K, N):
        w = jnp.pad(w, ((0, Kp - K), (0, Np - N)))
    if Np != N:
        b = jnp.pad(b, ((0, 0), (0, Np - N)))

    out = pl.pallas_call(
        matmul_bias_kernel,
        out_shape=jax.ShapeDtypeStruct((Mp, Np), out_dtype),
        grid_spec=pltpu.PrefetchScalarGridSpec(
            num_scalar_prefetch=0,
            grid=(Mp // tm, Np // tn, Kp // tk),
            in_specs=[
                pl.BlockSpec((tm, tk), lambda i, j, k: (i, k)),
                pl.BlockSpec((tk, tn), lambda i, j, k: (k, j)),
                pl.BlockSpec((1, tn), lambda i, j, k: (0, j)),
            ],
            out_specs=pl.BlockSpec((tm, tn), lambda i, j, k: (i, j)),
            scratch_shapes=[pltpu.VMEM((tm, tn), jnp.float32)],
        ),
        compiler_params=pltpu.CompilerParams(
            dimension_semantics=("parallel", "parallel", "arbitrary")),
    )(x, w, b)
    if (Mp, Np) != (M, N):
        out = out[:M, :N]
    return out


# ----------------------------- LSTM recurrence ------------------------------
def lstm_recurrence_kernel(gx_ref, whh_ref, out_ref, h_ref, c_ref):
    # gx_ref:  (Tb, B, 4H)  precomputed x @ W_ih + (b_ih + b_hh), f32
    # whh_ref: (H, 4H)      hidden->gates weights (bf16), gate order [i, f, g, o]
    # out_ref: (Tb, B, H)   per-step hidden state (bf16)
    # h_ref/c_ref: (B, H)   f32 VMEM scratch carried across grid iterations
    @pl.when(pl.program_id(0) == 0)
    def _():
        h_ref[...] = jnp.zeros_like(h_ref)
        c_ref[...] = jnp.zeros_like(c_ref)

    whh = whh_ref[...]
    H = whh.shape[0]
    Tb = gx_ref.shape[0]

    def step(t, _):
        h = h_ref[...]
        c = c_ref[...]
        # Only the unavoidable recurrent matmul sits on the serial path.
        gates = gx_ref[t] + jnp.dot(h.astype(whh.dtype), whh,
                                    preferred_element_type=jnp.float32)
        i_g = jax.nn.sigmoid(gates[:, 0 * H:1 * H])   # lane-aligned slices (H % 128 == 0)
        f_g = jax.nn.sigmoid(gates[:, 1 * H:2 * H])
        g_g = jnp.tanh(gates[:, 2 * H:3 * H])
        o_g = jax.nn.sigmoid(gates[:, 3 * H:4 * H])
        c_new = f_g * c + i_g * g_g                   # f32 gate math (v5e-safe)
        h_new = o_g * jnp.tanh(c_new)
        h_ref[...] = h_new
        c_ref[...] = c_new
        out_ref[t] = h_new.astype(out_ref.dtype)
        return 0

    # Unrolled so the next step's gates load / MXU push overlaps EUP/VPU work.
    lax.fori_loop(0, Tb, step, 0, unroll=True)


def lstm_forward(gates_x, w_hh_t, out_dtype, time_block):
    """gates_x: (Tp, Bp, 4Hp) f32 time-major; w_hh_t: (Hp, 4Hp)."""
    Tp, Bp, G = gates_x.shape
    Hp = w_hh_t.shape[0]
    # TODO(synk): for large B, add a parallel batch grid axis (v7x megacore).
    return pl.pallas_call(
        lstm_recurrence_kernel,
        out_shape=jax.ShapeDtypeStruct((Tp, Bp, Hp), out_dtype),
        grid_spec=pltpu.PrefetchScalarGridSpec(
            num_scalar_prefetch=0,
            grid=(Tp // time_block,),
            in_specs=[
                pl.BlockSpec((time_block, Bp, G), lambda t: (t, 0, 0)),
                pl.BlockSpec((Hp, G), lambda t: (0, 0)),
            ],
            out_specs=pl.BlockSpec((time_block, Bp, Hp), lambda t: (t, 0, 0)),
            scratch_shapes=[pltpu.VMEM((Bp, Hp), jnp.float32),
                            pltpu.VMEM((Bp, Hp), jnp.float32)],
        ),
        compiler_params=pltpu.CompilerParams(
            dimension_semantics=("arbitrary",)),   # recurrence is serial in time
    )(gates_x, w_hh_t)


# ------------------------------- parameters ---------------------------------
def init_params(key, embed_size, hidden_size, vocab_size):
    E, H, V = embed_size, hidden_size, vocab_size
    Ep, Hp, Vp = _round_up(E, 128), _round_up(H, 128), _round_up(V, 128)
    ks = jax.random.split(key, 6)
    s = 1.0 / (H ** 0.5)
    # word_embeddings: PyTorch default Embedding init ~ N(0, 1)
    word_emb = jax.random.normal(ks[0], (V, E), jnp.float32)
    # nn.LSTM default init ~ U(-1/sqrt(H), 1/sqrt(H)), gate order [i, f, g, o]
    w_ih = jax.random.uniform(ks[1], (4 * H, E), jnp.float32, -s, s)
    w_hh = jax.random.uniform(ks[2], (4 * H, H), jnp.float32, -s, s)
    b_ih = jax.random.uniform(ks[3], (4 * H,), jnp.float32, -s, s)
    b_hh = jax.random.uniform(ks[4], (4 * H,), jnp.float32, -s, s)
    # linear: init_weights() -> weight ~ U(-0.1, 0.1), bias = 0
    lin_w = jax.random.uniform(ks[5], (V, H), jnp.float32, -0.1, 0.1)
    lin_b = jnp.zeros((V,), jnp.float32)

    # Per-gate zero-padding H->Hp, E->Ep, V->Vp (lane-dense layouts). Padded
    # hidden units have zero weights/bias, stay exactly 0 through the
    # recurrence, and are never read by the vocab projection.
    w_ih_p = jnp.zeros((4, Hp, Ep), jnp.float32).at[:, :H, :E].set(
        w_ih.reshape(4, H, E))
    w_hh_p = jnp.zeros((4, Hp, Hp), jnp.float32).at[:, :H, :H].set(
        w_hh.reshape(4, H, H))
    b_p = jnp.zeros((4, Hp), jnp.float32).at[:, :H].set(
        (b_ih + b_hh).reshape(4, H))
    lin_w_p = jnp.zeros((Hp, Vp), jnp.float32).at[:H, :V].set(lin_w.T)
    lin_b_p = jnp.zeros((1, Vp), jnp.float32).at[:, :V].set(lin_b[None, :])

    # NOTE: self.embed exists in __init__ but is unused in forward(); omitted.
    return {
        "word_embeddings": word_emb,                                  # (V, E)  f32
        "w_ih_t": w_ih_p.reshape(4 * Hp, Ep).T.astype(MATMUL_DTYPE),  # (Ep, 4Hp) bf16
        "w_hh_t": w_hh_p.reshape(4 * Hp, Hp).T.astype(MATMUL_DTYPE),  # (Hp, 4Hp) bf16
        "b_4h": b_p.reshape(1, 4 * Hp),                               # (1, 4Hp) f32
        "linear_w": lin_w_p.astype(MATMUL_DTYPE),                     # (Hp, Vp) bf16
        "linear_b": lin_b_p,                                          # (1, Vp)  f32
    }


# --------------------------------- forward ----------------------------------
def decoder_rnn_forward(params, features, captions):
    """features: (B, E) float32, captions: (B, L) int32 -> logits (B, L, V)."""
    V, E = params["word_embeddings"].shape
    Ep = params["w_ih_t"].shape[0]
    Hp = params["w_hh_t"].shape[0]

    # Embedding gather + concat of image features (glue, plain JAX).
    emb = params["word_embeddings"][captions[:, :-1]]                # (B, L-1, E)
    inputs = jnp.concatenate(
        [features[:, None, :].astype(jnp.float32), emb], axis=1)     # (B, T, E)
    B, T, _ = inputs.shape

    Bp = _round_up(B, 8)
    Tb = min(TIME_BLOCK, T)
    Tp = _round_up(T, Tb)

    # Time-major, padded to (Tp, Bp, Ep). Padded batch rows are independent and
    # padded time steps come after all real ones, so padding never contaminates.
    x = jnp.transpose(inputs, (1, 0, 2))                             # (T, B, E)
    x = jnp.pad(x, ((0, Tp - T), (0, Bp - B), (0, Ep - E)))

    # 1) Input projection hoisted out of the recurrence: one big MXU matmul,
    #    bias folded in here (nothing but h @ W_hh left on the serial path).
    gates_x = matmul_bias(
        x.reshape(Tp * Bp, Ep).astype(MATMUL_DTYPE),
        params["w_ih_t"], params["b_4h"], jnp.float32)               # (Tp*Bp, 4Hp)
    gates_x = gates_x.reshape(Tp, Bp, 4 * Hp)

    # 2) Serial LSTM recurrence (time-blocked grid, h/c in VMEM scratch).
    h_tm = lstm_forward(gates_x, params["w_hh_t"], MATMUL_DTYPE, Tb)  # (Tp, Bp, Hp)

    # 3) Tiled vocab projection directly on the time-major flattened hidden
    #    states (no transpose / HBM round-trip between the two kernels).
    logits = matmul_bias(
        h_tm.reshape(Tp * Bp, Hp),
        params["linear_w"], params["linear_b"], jnp.float32)         # (Tp*Bp, Vp)
    logits = logits.reshape(Tp, Bp, -1)[:T, :B, :V]
    return jnp.transpose(logits, (1, 0, 2))                          # (B, T, V)


# ------------------------- pure-JAX reference (check) ------------------------
def reference_forward(params, features, captions):
    V, E = params["word_embeddings"].shape
    Ep = params["w_ih_t"].shape[0]
    Hp = params["w_hh_t"].shape[0]
    emb = params["word_embeddings"][captions[:, :-1]]
    inputs = jnp.concatenate([features[:, None, :], emb], axis=1)    # (B, T, E)
    B, T, _ = inputs.shape
    x = jnp.pad(inputs, ((0, 0), (0, 0), (0, Ep - E))).astype(MATMUL_DTYPE)
    gates_x = jnp.einsum("bte,eg->btg", x, params["w_ih_t"],
                         preferred_element_type=jnp.float32) + params["b_4h"]

    def step(carry, gx_t):
        h, c = carry
        gates = gx_t + jnp.dot(h.astype(MATMUL_DTYPE), params["w_hh_t"],
                               preferred_element_type=jnp.float32)
        i = jax.nn.sigmoid(gates[:, 0 * Hp:1 * Hp])
        f = jax.nn.sigmoid(gates[:, 1 * Hp:2 * Hp])
        g = jnp.tanh(gates[:, 2 * Hp:3 * Hp])
        o = jax.nn.sigmoid(gates[:, 3 * Hp:4 * Hp])
        c = f * c + i * g
        h = o * jnp.tanh(c)
        return (h, c), h

    h0 = jnp.zeros((B, Hp), jnp.float32)
    c0 = jnp.zeros((B, Hp), jnp.float32)
    _, hs = lax.scan(step, (h0, c0), jnp.transpose(gates_x, (1, 0, 2)))
    hs = jnp.transpose(hs, (1, 0, 2))                                # (B, T, Hp)
    logits = jnp.einsum("bth,hv->btv", hs.astype(MATMUL_DTYPE), params["linear_w"],
                        preferred_element_type=jnp.float32) + params["linear_b"]
    return logits[..., :V]


if __name__ == "__main__":
    # Small shapes consistent with the module's forward pass.
    EMBED_SIZE = 32
    HIDDEN_SIZE = 32
    VOCAB_SIZE = 128
    BATCH = 2
    CAP_LEN = 8   # T = (CAP_LEN - 1) + 1 = 8

    root = jax.random.PRNGKey(0)
    k_params, k_feat, k_cap = jax.random.split(root, 3)

    params = init_params(k_params, EMBED_SIZE, HIDDEN_SIZE, VOCAB_SIZE)
    features = jax.random.normal(k_feat, (BATCH, EMBED_SIZE), jnp.float32)
    captions = jax.random.randint(k_cap, (BATCH, CAP_LEN), 0, VOCAB_SIZE,
                                  dtype=jnp.int32)

    out = jax.jit(decoder_rnn_forward)(params, features, captions)
    out = jax.block_until_ready(out)
    assert out.shape == (BATCH, CAP_LEN, VOCAB_SIZE), out.shape

    ref = jax.jit(reference_forward)(params, features, captions)
    err = float(jnp.max(jnp.abs(out - ref)))
    assert err < 2e-2, f"max abs err vs reference: {err}"

    print("KERNEL_OK")
</pallas_src>

<mosaic_0001>
module attributes {stable_mosaic.version = 11 : i64} {
  func.func @matmul_bias_kernel(%arg0: i32, %arg1: i32, %arg2: i32, %arg3: memref<64x128xbf16, #tpu.memory_space<vmem>>, %arg4: memref<128x512xbf16, #tpu.memory_space<vmem>>, %arg5: memref<1x512xf32, #tpu.memory_space<vmem>>, %arg6: memref<64x512xf32, #tpu.memory_space<vmem>>, %arg7: memref<64x512xf32, #tpu.memory_space<vmem>>) attributes {dimension_semantics = [#tpu.dimension_semantics<parallel>, #tpu.dimension_semantics<parallel>, #tpu.dimension_semantics<arbitrary>], iteration_bounds = array<i64: 1, 1, 1>, scalar_prefetch = 0 : i64, scratch_operands = 1 : i64, tpu.core_type = #tpu.core_type<tc>, window_params = [{transform_indices = @transform_0, window_bounds = array<i64: 64, 128>}, {transform_indices = @transform_1, window_bounds = array<i64: 128, 512>}, {transform_indices = @transform_2, window_bounds = array<i64: 1, 512>}, {transform_indices = @transform_3, window_bounds = array<i64: 64, 512>}]} {
    %c0_i32 = arith.constant 0 : i32
    %0 = arith.cmpi eq, %arg2, %c0_i32 : i32
    %1 = arith.extui %0 : i1 to i32
    %c0_i32_0 = arith.constant 0 : i32
    %2 = arith.cmpi ne, %1, %c0_i32_0 : i32
    scf.if %2 {
      %cst_10 = arith.constant 0.000000e+00 : f32
      %12 = vector.broadcast %cst_10 : f32 to vector<64x512xf32>
      %c0_11 = arith.constant 0 : index
      %c0_12 = arith.constant 0 : index
      %13 = vector.load %arg7[%c0_11, %c0_12] : memref<64x512xf32, #tpu.memory_space<vmem>>, vector<64x512xf32>
      tpu.vector_store %arg7[%c0_11, %c0_12], %12 {strides = array<i32>} : memref<64x512xf32, #tpu.memory_space<vmem>>, vector<64x512xf32>,
    } else {
    }
    %c0 = arith.constant 0 : index
    %c0_1 = arith.constant 0 : index
    %3 = vector.load %arg7[%c0, %c0_1] : memref<64x512xf32, #tpu.memory_space<vmem>>, vector<64x512xf32>
    %c0_2 = arith.constant 0 : index
    %c0_3 = arith.constant 0 : index
    %4 = vector.load %arg3[%c0_2, %c0_3] : memref<64x128xbf16, #tpu.memory_space<vmem>>, vector<64x128xbf16>
    %c0_4 = arith.constant 0 : index
    %c0_5 = arith.constant 0 : index
    %5 = vector.load %arg4[%c0_4, %c0_5] : memref<128x512xbf16, #tpu.memory_space<vmem>>, vector<128x512xbf16>
    %cst = arith.constant dense<0.000000e+00> : vector<64x512xf32>
    %6 = tpu.matmul %4, %5, %cst {dimension_numbers = #tpu.dot_dimension_numbers<[1], [0], [0], [1], [0, 0, 1, 1], [], []>} : vector<64x128xbf16>, vector<128x512xbf16>, vector<64x512xf32> -> vector<64x512xf32>
    %7 = arith.addf %3, %6 : vector<64x512xf32>
    %c0_6 = arith.constant 0 : index
    %c0_7 = arith.constant 0 : index
    %8 = vector.load %arg7[%c0_6, %c0_7] : memref<64x512xf32, #tpu.memory_space<vmem>>, vector<64x512xf32>
    tpu.vector_store %arg7[%c0_6, %c0_7], %7 {strides = array<i32>} : memref<64x512xf32, #tpu.memory_space<vmem>>, vector<64x512xf32>,
    %c0_i32_8 = arith.constant 0 : i32
    %9 = arith.cmpi eq, %arg2, %c0_i32_8 : i32
    %10 = arith.extui %9 : i1 to i32
    %c0_i32_9 = arith.constant 0 : i32
    %11 = arith.cmpi ne, %10, %c0_i32_9 : i32
    scf.if %11 {
      %c0_10 = arith.constant 0 : index
      %c0_11 = arith.constant 0 : index
      %12 = vector.load %arg7[%c0_10, %c0_11] : memref<64x512xf32, #tpu.memory_space<vmem>>, vector<64x512xf32>
      %c0_12 = arith.constant 0 : index
      %c0_13 = arith.constant 0 : index
      %13 = vector.load %arg5[%c0_12, %c0_13] : memref<1x512xf32, #tpu.memory_space<vmem>>, vector<1x512xf32>
      %14 = vector.broadcast %13 : vector<1x512xf32> to vector<64x512xf32>
      %15 = arith.addf %12, %14 : vector<64x512xf32>
      %c0_14 = arith.constant 0 : index
      %c0_15 = arith.constant 0 : index
      %16 = vector.load %arg6[%c0_14, %c0_15] : memref<64x512xf32, #tpu.memory_space<vmem>>, vector<64x512xf32>
      tpu.vector_store %arg6[%c0_14, %c0_15], %15 {strides = array<i32>} : memref<64x512xf32, #tpu.memory_space<vmem>>, vector<64x512xf32>,
    } else {
    }
    return
  }
  func.func @transform_0(%arg0: i32, %arg1: i32, %arg2: i32) -> (i32, i32) {
    %c0_i32 = arith.constant 0 : i32
    return %arg0, %arg2 : i32, i32
  }
  func.func @transform_1(%arg0: i32, %arg1: i32, %arg2: i32) -> (i32, i32) {
    %c0_i32 = arith.constant 0 : i32
    return %arg2, %arg1 : i32, i32
  }
  func.func @transform_2(%arg0: i32, %arg1: i32, %arg2: i32) -> (i32, i32) {
    %c0_i32 = arith.constant 0 : i32
    %c0_i32_0 = arith.constant 0 : i32
    return %c0_i32, %arg1 : i32, i32
  }
  func.func @transform_3(%arg0: i32, %arg1: i32, %arg2: i32) -> (i32, i32) {
    %c0_i32 = arith.constant 0 : i32
    return %arg0, %arg1 : i32, i32
  }
}

module attributes {stable_mosaic.version = 11 : i64} {
  func.func @matmul_bias_kernel(%arg0: i32, %arg1: i32, %arg2: i32, %arg3: memref<64x128xbf16, #tpu.memory_space<vmem>>, %arg4: memref<128x128xbf16, #tpu.memory_space<vmem>>, %arg5: memref<1x128xf32, #tpu.memory_space<vmem>>, %arg6: memref<64x128xf32, #tpu.memory_space<vmem>>, %arg7: memref<64x128xf32, #tpu.memory_space<vmem>>) attributes {dimension_semantics = [#tpu.dimension_semantics<parallel>, #tpu.dimension_semantics<parallel>, #tpu.dimension_semantics<arbitrary>], iteration_bounds = array<i64: 1, 1, 1>, scalar_prefetch = 0 : i64, scratch_operands = 1 : i64, tpu.core_type = #tpu.core_type<tc>, window_params = [{transform_indices = @transform_0, window_bounds = array<i64: 64, 128>}, {transform_indices = @transform_1, window_bounds = array<i64: 128, 128>}, {transform_indices = @transform_2, window_bounds = array<i64: 1, 128>}, {transform_indices = @transform_3, window_bounds = array<i64: 64, 128>}]} {
    %c0_i32 = arith.constant 0 : i32
    %0 = arith.cmpi eq, %arg2, %c0_i32 : i32
    %1 = arith.extui %0 : i1 to i32
    %c0_i32_0 = arith.constant 0 : i32
    %2 = arith.cmpi ne, %1, %c0_i32_0 : i32
    scf.if %2 {
      %cst_10 = arith.constant 0.000000e+00 : f32
      %12 = vector.broadcast %cst_10 : f32 to vector<64x128xf32>
      %c0_11 = arith.constant 0 : index
      %c0_12 = arith.constant 0 : index
      %13 = vector.load %arg7[%c0_11, %c0_12] : memref<64x128xf32, #tpu.memory_space<vmem>>, vector<64x128xf32>
      tpu.vector_store %arg7[%c0_11, %c0_12], %12 {strides = array<i32>} : memref<64x128xf32, #tpu.memory_space<vmem>>, vector<64x128xf32>,
    } else {
    }
    %c0 = arith.constant 0 : index
    %c0_1 = arith.constant 0 : index
    %3 = vector.load %arg7[%c0, %c0_1] : memref<64x128xf32, #tpu.memory_space<vmem>>, vector<64x128xf32>
    %c0_2 = arith.constant 0 : index
    %c0_3 = arith.constant 0 : index
    %4 = vector.load %arg3[%c0_2, %c0_3] : memref<64x128xbf16, #tpu.memory_space<vmem>>, vector<64x128xbf16>
    %c0_4 = arith.constant 0 : index
    %c0_5 = arith.constant 0 : index
    %5 = vector.load %arg4[%c0_4, %c0_5] : memref<128x128xbf16, #tpu.memory_space<vmem>>, vector<128x128xbf16>
    %cst = arith.constant dense<0.000000e+00> : vector<64x128xf32>
    %6 = tpu.matmul %4, %5, %cst {dimension_numbers = #tpu.dot_dimension_numbers<[1], [0], [0], [1], [0, 0, 1, 1], [], []>} : vector<64x128xbf16>, vector<128x128xbf16>, vector<64x128xf32> -> vector<64x128xf32>
    %7 = arith.addf %3, %6 : vector<64x128xf32>
    %c0_6 = arith.constant 0 : index
    %c0_7 = arith.constant 0 : index
    %8 = vector.load %arg7[%c0_6, %c0_7] : memref<64x128xf32, #tpu.memory_space<vmem>>, vector<64x128xf32>
    tpu.vector_store %arg7[%c0_6, %c0_7], %7 {strides = array<i32>} : memref<64x128xf32, #tpu.memory_space<vmem>>, vector<64x128xf32>,
    %c0_i32_8 = arith.constant 0 : i32
    %9 = arith.cmpi eq, %arg2, %c0_i32_8 : i32
    %10 = arith.extui %9 : i1 to i32
    %c0_i32_9 = arith.constant 0 : i32
    %11 = arith.cmpi ne, %10, %c0_i32_9 : i32
    scf.if %11 {
      %c0_10 = arith.constant 0 : index
      %c0_11 = arith.constant 0 : index
      %12 = vector.load %arg7[%c0_10, %c0_11] : memref<64x128xf32, #tpu.memory_space<vmem>>, vector<64x128xf32>
      %c0_12 = arith.constant 0 : index
      %c0_13 = arith.constant 0 : index
      %13 = vector.load %arg5[%c0_12, %c0_13] : memref<1x128xf32, #tpu.memory_space<vmem>>, vector<1x128xf32>
      %14 = vector.broadcast %13 : vector<1x128xf32> to vector<64x128xf32>
      %15 = arith.addf %12, %14 : vector<64x128xf32>
      %c0_14 = arith.constant 0 : index
      %c0_15 = arith.constant 0 : index
      %16 = vector.load %arg6[%c0_14, %c0_15] : memref<64x128xf32, #tpu.memory_space<vmem>>, vector<64x128xf32>
      tpu.vector_store %arg6[%c0_14, %c0_15], %15 {strides = array<i32>} : memref<64x128xf32, #tpu.memory_space<vmem>>, vector<64x128xf32>,
    } else {
    }
    return
  }
  func.func @transform_0(%arg0: i32, %arg1: i32, %arg2: i32) -> (i32, i32) {
    %c0_i32 = arith.constant 0 : i32
    return %arg0, %arg2 : i32, i32
  }
  func.func @transform_1(%arg0: i32, %arg1: i32, %arg2: i32) -> (i32, i32) {
    %c0_i32 = arith.constant 0 : i32
    return %arg2, %arg1 : i32, i32
  }
  func.func @transform_2(%arg0: i32, %arg1: i32, %arg2: i32) -> (i32, i32) {
    %c0_i32 = arith.constant 0 : i32
    %c0_i32_0 = arith.constant 0 : i32
    return %c0_i32, %arg1 : i32, i32
  }
  func.func @transform_3(%arg0: i32, %arg1: i32, %arg2: i32) -> (i32, i32) {
    %c0_i32 = arith.constant 0 : i32
    return %arg0, %arg1 : i32, i32
  }
}

module attributes {stable_mosaic.version = 11 : i64} {
  func.func @lstm_recurrence_kernel(%arg0: i32, %arg1: memref<8x8x512xf32, #tpu.memory_space<vmem>>, %arg2: memref<128x512xbf16, #tpu.memory_space<vmem>>, %arg3: memref<8x8x128xbf16, #tpu.memory_space<vmem>>, %arg4: memref<8x128xf32, #tpu.memory_space<vmem>>, %arg5: memref<8x128xf32, #tpu.memory_space<vmem>>) attributes {dimension_semantics = [#tpu.dimension_semantics<arbitrary>], iteration_bounds = array<i64: 1>, scalar_prefetch = 0 : i64, scratch_operands = 2 : i64, tpu.core_type = #tpu.core_type<tc>, window_params = [{transform_indices = @transform_0, window_bounds = array<i64: 8, 8, 512>}, {pipeline_mode = #tpu.pipeline_mode<synchronous>, transform_indices = @transform_1, window_bounds = array<i64: 128, 512>}, {transform_indices = @transform_2, window_bounds = array<i64: 8, 8, 128>}]} {
    %c0_i32 = arith.constant 0 : i32
    %0 = arith.cmpi eq, %arg0, %c0_i32 : i32
    %1 = arith.extui %0 : i1 to i32
    %c0_i32_0 = arith.constant 0 : i32
    %2 = arith.cmpi ne, %1, %c0_i32_0 : i32
    scf.if %2 {
      %cst_130 = arith.constant 0.000000e+00 : f32
      %324 = vector.broadcast %cst_130 : f32 to vector<8x128xf32>
      %c0_131 = arith.constant 0 : index
      %c0_132 = arith.constant 0 : index
      %325 = vector.load %arg4[%c0_131, %c0_132] : memref<8x128xf32, #tpu.memory_space<vmem>>, vector<8x128xf32>
      tpu.vector_store %arg4[%c0_131, %c0_132], %324 {strides = array<i32>} : memref<8x128xf32, #tpu.memory_space<vmem>>, vector<8x128xf32>,
      %cst_133 = arith.constant 0.000000e+00 : f32
      %326 = vector.broadcast %cst_133 : f32 to vector<8x128xf32>
      %c0_134 = arith.constant 0 : index
      %c0_135 = arith.constant 0 : index
      %327 = vector.load %arg5[%c0_134, %c0_135] : memref<8x128xf32, #tpu.memory_space<vmem>>, vector<8x128xf32>
      tpu.vector_store %arg5[%c0_134, %c0_135], %326 {strides = array<i32>} : memref<8x128xf32, #tpu.memory_space<vmem>>, vector<8x128xf32>,
    } else {
    }
    %c0 = arith.constant 0 : index
    %c0_1 = arith.constant 0 : index
    %3 = vector.load %arg2[%c0, %c0_1] : memref<128x512xbf16, #tpu.memory_space<vmem>>, vector<128x512xbf16>
    %c0_i32_2 = arith.constant 0 : i32
    %c0_3 = arith.constant 0 : index
    %c0_4 = arith.constant 0 : index
    %4 = vector.load %arg4[%c0_3, %c0_4] : memref<8x128xf32, #tpu.memory_space<vmem>>, vector<8x128xf32>
    %c0_5 = arith.constant 0 : index
    %c0_6 = arith.constant 0 : index
    %5 = vector.load %arg5[%c0_5, %c0_6] : memref<8x128xf32, #tpu.memory_space<vmem>>, vector<8x128xf32>
    %6 = arith.index_cast %c0_i32_2 : i32 to index
    %c0_7 = arith.constant 0 : index
    %c0_8 = arith.constant 0 : index
    %7 = vector.load %arg1[%6, %c0_7, %c0_8] : memref<8x8x512xf32, #tpu.memory_space<vmem>>, vector<1x8x512xf32>
    %8 = vector.shape_cast %7 : vector<1x8x512xf32> to vector<8x512xf32>
    %9 = arith.truncf %4 : vector<8x128xf32> to vector<8x128xbf16>
    %cst = arith.constant dense<0.000000e+00> : vector<8x512xf32>
    %10 = tpu.matmul %9, %3, %cst {dimension_numbers = #tpu.dot_dimension_numbers<[1], [0], [0], [1], [0, 0, 1, 1], [], []>} : vector<8x128xbf16>, vector<128x512xbf16>, vector<8x512xf32> -> vector<8x512xf32>
    %11 = arith.addf %8, %10 : vector<8x512xf32>
    %12 = vector.extract_strided_slice %11 {offsets = [0, 0], sizes = [8, 128], strides = [1, 1]} : vector<8x512xf32> to vector<8x128xf32>
    %13 = arith.negf %12 : vector<8x128xf32>
    %14 = math.exp %13 : vector<8x128xf32>
    %cst_9 = arith.constant 1.000000e+00 : f32
    %15 = vector.broadcast %cst_9 : f32 to vector<8x128xf32>
    %16 = arith.addf %15, %14 : vector<8x128xf32>
    %17 = arith.divf %15, %16 : vector<8x128xf32>
    %18 = vector.extract_strided_slice %11 {offsets = [0, 128], sizes = [8, 128], strides = [1, 1]} : vector<8x512xf32> to vector<8x128xf32>
    %19 = arith.negf %18 : vector<8x128xf32>
    %20 = math.exp %19 : vector<8x128xf32>
    %cst_10 = arith.constant 1.000000e+00 : f32
    %21 = vector.broadcast %cst_10 : f32 to vector<8x128xf32>
    %22 = arith.addf %21, %20 : vector<8x128xf32>
    %23 = arith.divf %21, %22 : vector<8x128xf32>
    %24 = vector.extract_strided_slice %11 {offsets = [0, 256], sizes = [8, 128], strides = [1, 1]} : vector<8x512xf32> to vector<8x128xf32>
    %25 = math.tanh %24 : vector<8x128xf32>
    %26 = vector.extract_strided_slice %11 {offsets = [0, 384], sizes = [8, 128], strides = [1, 1]} : vector<8x512xf32> to vector<8x128xf32>
    %27 = arith.negf %26 : vector<8x128xf32>
    %28 = math.exp %27 : vector<8x128xf32>
    %cst_11 = arith.constant 1.000000e+00 : f32
    %29 = vector.broadcast %cst_11 : f32 to vector<8x128xf32>
    %30 = arith.addf %29, %28 : vector<8x128xf32>
    %31 = arith.divf %29, %30 : vector<8x128xf32>
    %32 = arith.mulf %23, %5 : vector<8x128xf32>
    %33 = arith.mulf %17, %25 : vector<8x128xf32>
    %34 = arith.addf %32, %33 : vector<8x128xf32>
    %35 = math.tanh %34 : vector<8x128xf32>
    %36 = arith.mulf %31, %35 : vector<8x128xf32>
    %c0_12 = arith.constant 0 : index
    %c0_13 = arith.constant 0 : index
    %37 = vector.load %arg4[%c0_12, %c0_13] : memref<8x128xf32, #tpu.memory_space<vmem>>, vector<8x128xf32>
    tpu.vector_store %arg4[%c0_12, %c0_13], %36 {strides = array<i32>} : memref<8x128xf32, #tpu.memory_space<vmem>>, vector<8x128xf32>,
    %c0_14 = arith.constant 0 : index
    %c0_15 = arith.constant 0 : index
    %38 = vector.load %arg5[%c0_14, %c0_15] : memref<8x128xf32, #tpu.memory_space<vmem>>, vector<8x128xf32>
    tpu.vector_store %arg5[%c0_14, %c0_15], %34 {strides = array<i32>} : memref<8x128xf32, #tpu.memory_space<vmem>>, vector<8x128xf32>,
    %39 = arith.truncf %36 : vector<8x128xf32> to vector<8x128xbf16>
    %40 = arith.index_cast %c0_i32_2 : i32 to index
    %c0_16 = arith.constant 0 : index
    %c0_17 = arith.constant 0 : index
    %41 = vector.load %arg3[%40, %c0_16, %c0_17] : memref<8x8x128xbf16, #tpu.memory_space<vmem>>, vector<1x8x128xbf16>
    %42 = vector.shape_cast %41 : vector<1x8x128xbf16> to vector<8x128xbf16>
    %43 = vector.shape_cast %39 : vector<8x128xbf16> to vector<1x8x128xbf16>
    tpu.vector_store %arg3[%40, %c0_16, %c0_17], %43 {strides = array<i32>} : memref<8x8x128xbf16, #tpu.memory_space<vmem>>, vector<1x8x128xbf16>,
    %c1_i32 = arith.constant 1 : i32
    %c0_18 = arith.constant 0 : index
    %c0_19 = arith.constant 0 : index
    %44 = vector.load %arg4[%c0_18, %c0_19] : memref<8x128xf32, #tpu.memory_space<vmem>>, vector<8x128xf32>
    %c0_20 = arith.constant 0 : index
    %c0_21 = arith.constant 0 : index
    %45 = vector.load %arg5[%c0_20, %c0_21] : memref<8x128xf32, #tpu.memory_space<vmem>>, vector<8x128xf32>
    %46 = arith.index_cast %c1_i32 : i32 to index
    %c0_22 = arith.constant 0 : index
    %c0_23 = arith.constant 0 : index
    %47 = vector.load %arg1[%46, %c0_22, %c0_23] : memref<8x8x512xf32, #tpu.memory_space<vmem>>, vector<1x8x512xf32>
    %48 = vector.shape_cast %47 : vector<1x8x512xf32> to vector<8x512xf32>
    %49 = arith.truncf %44 : vector<8x128xf32> to vector<8x128xbf16>
    %cst_24 = arith.constant dense<0.000000e+00> : vector<8x512xf32>
    %50 = tpu.matmul %49, %3, %cst_24 {dimension_numbers = #tpu.dot_dimension_numbers<[1], [0], [0], [1], [0, 0, 1, 1], [], []>} : vector<8x128xbf16>, vector<128x512xbf16>, vector<8x512xf32> -> vector<8x512xf32>
    %51 = arith.addf %48, %50 : vector<8x512xf32>
    %52 = vector.extract_strided_slice %51 {offsets = [0, 0], sizes = [8, 128], strides = [1, 1]} : vector<8x512xf32> to vector<8x128xf32>
    %53 = arith.negf %52 : vector<8x128xf32>
    %54 = math.exp %53 : vector<8x128xf32>
    %cst_25 = arith.constant 1.000000e+00 : f32
    %55 = vector.broadcast %cst_25 : f32 to vector<8x128xf32>
    %56 = arith.addf %55, %54 : vector<8x128xf32>
    %57 = arith.divf %55, %56 : vector<8x128xf32>
    %58 = vector.extract_strided_slice %51 {offsets = [0, 128], sizes = [8, 128], strides = [1, 1]} : vector<8x512xf32> to vector<8x128xf32>
    %59 = arith.negf %58 : vector<8x128xf32>
    %60 = math.exp %59 : vector<8x128xf32>
    %cst_26 = arith.constant 1.000000e+00 : f32
    %61 = vector.broadcast %cst_26 : f32 to vector<8x128xf32>
    %62 = arith.addf %61, %60 : vector<8x128xf32>
    %63 = arith.divf %61, %62 : vector<8x128xf32>
    %64 = vector.extract_strided_slice %51 {offsets = [0, 256], sizes = [8, 128], strides = [1, 1]} : vector<8x512xf32> to vector<8x128xf32>
    %65 = math.tanh %64 : vector<8x128xf32>
    %66 = vector.extract_strided_slice %51 {offsets = [0, 384], sizes = [8, 128], strides = [1, 1]} : vector<8x512xf32> to vector<8x128xf32>
    %67 = arith.negf %66 : vector<8x128xf32>
    %68 = math.exp %67 : vector<8x128xf32>
    %cst_27 = arith.constant 1.000000e+00 : f32
    %69 = vector.broadcast %cst_27 : f32 to vector<8x128xf32>
    %70 = arith.addf %69, %68 : vector<8x128xf32>
    %71 = arith.divf %69, %70 : vector<8x128xf32>
    %72 = arith.mulf %63, %45 : vector<8x128xf32>
    %73 = arith.mulf %57, %65 : vector<8x128xf32>
    %74 = arith.addf %72, %73 : vector<8x128xf32>
    %75 = math.tanh %74 : vector<8x128xf32>
    %76 = arith.mulf %71, %75 : vector<8x128xf32>
    %c0_28 = arith.constant 0 : index
    %c0_29 = arith.constant 0 : index
    %77 = vector.load %arg4[%c0_28, %c0_29] : memref<8x128xf32, #tpu.memory_space<vmem>>, vector<8x128xf32>
    tpu.vector_store %arg4[%c0_28, %c0_29], %76 {strides = array<i32>} : memref<8x128xf32, #tpu.memory_space<vmem>>, vector<8x128xf32>,
    %c0_30 = arith.constant 0 : index
    %c0_31 = arith.constant 0 : index
    %78 = vector.load %arg5[%c0_30, %c0_31] : memref<8x128xf32, #tpu.memory_space<vmem>>, vector<8x128xf32>
    tpu.vector_store %arg5[%c0_30, %c0_31], %74 {strides = array<i32>} : memref<8x128xf32, #tpu.memory_space<vmem>>, vector<8x128xf32>,
    %79 = arith.truncf %76 : vector<8x128xf32> to vector<8x128xbf16>
    %80 = arith.index_cast %c1_i32 : i32 to index
    %c0_32 = arith.constant 0 : index
    %c0_33 = arith.constant 0 : index
    %81 = vector.load %arg3[%80, %c0_32, %c0_33] : memref<8x8x128xbf16, #tpu.memory_space<vmem>>, vector<1x8x128xbf16>
    %82 = vector.shape_cast %81 : vector<1x8x128xbf16> to vector<8x128xbf16>
    %83 = vector.shape_cast %79 : vector<8x128xbf16> to vector<1x8x128xbf16>
    tpu.vector_store %arg3[%80, %c0_32, %c0_33], %83 {strides = array<i32>} : memref<8x8x128xbf16, #tpu.memory_space<vmem>>, vector<1x8x128xbf16>,
    %c2_i32 = arith.constant 2 : i32
    %c0_34 = arith.constant 0 : index
    %c0_35 = arith.constant 0 : index
    %84 = vector.load %arg4[%c0_34, %c0_35] : memref<8x128xf32, #tpu.memory_space<vmem>>, vector<8x128xf32>
    %c0_36 = arith.constant 0 : index
    %c0_37 = arith.constant 0 : index
    %85 = vector.load %arg5[%c0_36, %c0_37] : memref<8x128xf32, #tpu.memory_space<vmem>>, vector<8x128xf32>
    %86 = arith.index_cast %c2_i32 : i32 to index
    %c0_38 = arith.constant 0 : index
    %c0_39 = arith.constant 0 : index
    %87 = vector.load %arg1[%86, %c0_38, %c0_39] : memref<8x8x512xf32, #tpu.memory_space<vmem>>, vector<1x8x512xf32>
    %88 = vector.shape_cast %87 : vector<1x8x512xf32> to vector<8x512xf32>
    %89 = arith.truncf %84 : vector<8x128xf32> to vector<8x128xbf16>
    %cst_40 = arith.constant dense<0.000000e+00> : vector<8x512xf32>
    %90 = tpu.matmul %89, %3, %cst_40 {dimension_numbers = #tpu.dot_dimension_numbers<[1], [0], [0], [1], [0, 0, 1, 1], [], []>} : vector<8x128xbf16>, vector<128x512xbf16>, vector<8x512xf32> -> vector<8x512xf32>
    %91 = arith.addf %88, %90 : vector<8x512xf32>
    %92 = vector.extract_strided_slice %91 {offsets = [0, 0], sizes = [8, 128], strides = [1, 1]} : vector<8x512xf32> to vector<8x128xf32>
    %93 = arith.negf %92 : vector<8x128xf32>
    %94 = math.exp %93 : vector<8x128xf32>
    %cst_41 = arith.constant 1.000000e+00 : f32
    %95 = vector.broadcast %cst_41 : f32 to vector<8x128xf32>
    %96 = arith.addf %95, %94 : vector<8x128xf32>
    %97 = arith.divf %95, %96 : vector<8x128xf32>
    %98 = vector.extract_strided_slice %91 {offsets = [0, 128], sizes = [8, 128], strides = [1, 1]} : vector<8x512xf32> to vector<8x128xf32>
    %99 = arith.negf %98 : vector<8x128xf32>
    %100 = math.exp %99 : vector<8x128xf32>
    %cst_42 = arith.constant 1.000000e+00 : f32
    %101 = vector.broadcast %cst_42 : f32 to vector<8x128xf32>
    %102 = arith.addf %101, %100 : vector<8x128xf32>
    %103 = arith.divf %101, %102 : vector<8x128xf32>
    %104 = vector.extract_strided_slice %91 {offsets = [0, 256], sizes = [8, 128], strides = [1, 1]} : vector<8x512xf32> to vector<8x128xf32>
    %105 = math.tanh %104 : vector<8x128xf32>
    %106 = vector.extract_strided_slice %91 {offsets = [0, 384], sizes = [8, 128], strides = [1, 1]} : vector<8x512xf32> to vector<8x128xf32>
    %107 = arith.negf %106 : vector<8x128xf32>
    %108 = math.exp %107 : vector<8x128xf32>
    %cst_43 = arith.constant 1.000000e+00 : f32
    %109 = vector.broadcast %cst_43 : f32 to vector<8x128xf32>
    %110 = arith.addf %109, %108 : vector<8x128xf32>
    %111 = arith.divf %109, %110 : vector<8x128xf32>
    %112 = arith.mulf %103, %85 : vector<8x128xf32>
    %113 = arith.mulf %97, %105 : vector<8x128xf32>
    %114 = arith.addf %112, %113 : vector<8x128xf32>
    %115 = math.tanh %114 : vector<8x128xf32>
    %116 = arith.mulf %111, %115 : vector<8x128xf32>
    %c0_44 = arith.constant 0 : index
    %c0_45 = arith.constant 0 : index
    %117 = vector.load %arg4[%c0_44, %c0_45] : memref<8x128xf32, #tpu.memory_space<vmem>>, vector<8x128xf32>
    tpu.vector_store %arg4[%c0_44, %c0_45], %116 {strides = array<i32>} : memref<8x128xf32, #tpu.memory_space<vmem>>, vector<8x128xf32>,
    %c0_46 = arith.constant 0 : index
    %c0_47 = arith.constant 0 : index
    %118 = vector.load %arg5[%c0_46, %c0_47] : memref<8x128xf32, #tpu.memory_space<vmem>>, vector<8x128xf32>
    tpu.vector_store %arg5[%c0_46, %c0_47], %114 {strides = array<i32>} : memref<8x128xf32, #tpu.memory_space<vmem>>, vector<8x128xf32>,
    %119 = arith.truncf %116 : vector<8x128xf32> to vector<8x128xbf16>
    %120 = arith.index_cast %c2_i32 : i32 to index
    %c0_48 = arith.constant 0 : index
    %c0_49 = arith.constant 0 : index
    %121 = vector.load %arg3[%120, %c0_48, %c0_49] : memref<8x8x128xbf16, #tpu.memory_space<vmem>>, vector<1x8x128xbf16>
    %122 = vector.shape_cast %121 : vector<1x8x128xbf16> to vector<8x128xbf16>
    %123 = vector.shape_cast %119 : vector<8x128xbf16> to vector<1x8x128xbf16>
    tpu.vector_store %arg3[%120, %c0_48, %c0_49], %123 {strides = array<i32>} : memref<8x8x128xbf16, #tpu.memory_space<vmem>>, vector<1x8x128xbf16>,
    %c3_i32 = arith.constant 3 : i32
    %c0_50 = arith.constant 0 : index
    %c0_51 = arith.constant 0 : index
    %124 = vector.load %arg4[%c0_50, %c0_51] : memref<8x128xf32, #tpu.memory_space<vmem>>, vector<8x128xf32>
    %c0_52 = arith.constant 0 : index
    %c0_53 = arith.constant 0 : index
    %125 = vector.load %arg5[%c0_52, %c0_53] : memref<8x128xf32, #tpu.memory_space<vmem>>, vector<8x128xf32>
    %126 = arith.index_cast %c3_i32 : i32 to index
    %c0_54 = arith.constant 0 : index
    %c0_55 = arith.constant 0 : index
    %127 = vector.load %arg1[%126, %c0_54, %c0_55] : memref<8x8x512xf32, #tpu.memory_space<vmem>>, vector<1x8x512xf32>
    %128 = vector.shape_cast %127 : vector<1x8x512xf32> to vector<8x512xf32>
    %129 = arith.truncf %124 : vector<8x128xf32> to vector<8x128xbf16>
    %cst_56 = arith.constant dense<0.000000e+00> : vector<8x512xf32>
    %130 = tpu.matmul %129, %3, %cst_56 {dimension_numbers = #tpu.dot_dimension_numbers<[1], [0], [0], [1], [0, 0, 1, 1], [], []>} : vector<8x128xbf16>, vector<128x512xbf16>, vector<8x512xf32> -> vector<8x512xf32>
    %131 = arith.addf %128, %130 : vector<8x512xf32>
    %132 = vector.extract_strided_slice %131 {offsets = [0, 0], sizes = [8, 128], strides = [1, 1]} : vector<8x512xf32> to vector<8x128xf32>
    %133 = arith.negf %132 : vector<8x128xf32>
    %134 = math.exp %133 : vector<8x128xf32>
    %cst_57 = arith.constant 1.000000e+00 : f32
    %135 = vector.broadcast %cst_57 : f32 to vector<8x128xf32>
    %136 = arith.addf %135, %134 : vector<8x128xf32>
    %137 = arith.divf %135, %136 : vector<8x128xf32>
    %138 = vector.extract_strided_slice %131 {offsets = [0, 128], sizes = [8, 128], strides = [1, 1]} : vector<8x512xf32> to vector<8x128xf32>
    %139 = arith.negf %138 : vector<8x128xf32>
    %140 = math.exp %139 : vector<8x128xf32>
    %cst_58 = arith.constant 1.000000e+00 : f32
    %141 = vector.broadcast %cst_58 : f32 to vector<8x128xf32>
    %142 = arith.addf %141, %140 : vector<8x128xf32>
    %143 = arith.divf %141, %142 : vector<8x128xf32>
    %144 = vector.extract_strided_slice %131 {offsets = [0, 256], sizes = [8, 128], strides = [1, 1]} : vector<8x512xf32> to vector<8x128xf32>
    %145 = math.tanh %144 : vector<8x128xf32>
    %146 = vector.extract_strided_slice %131 {offsets = [0, 384], sizes = [8, 128], strides = [1, 1]} : vector<8x512xf32> to vector<8x128xf32>
    %147 = arith.negf %146 : vector<8x128xf32>
    %148 = math.exp %147 : vector<8x128xf32>
    %cst_59 = arith.constant 1.000000e+00 : f32
    %149 = vector.broadcast %cst_59 : f32 to vector<8x128xf32>
    %150 = arith.addf %149, %148 : vector<8x128xf32>
    %151 = arith.divf %149, %150 : vector<8x128xf32>
    %152 = arith.mulf %143, %125 : vector<8x128xf32>
    %153 = arith.mulf %137, %145 : vector<8x128xf32>
    %154 = arith.addf %152, %153 : vector<8x128xf32>
    %155 = math.tanh %154 : vector<8x128xf32>
    %156 = arith.mulf %151, %155 : vector<8x128xf32>
    %c0_60 = arith.constant 0 : index
    %c0_61 = arith.constant 0 : index
    %157 = vector.load %arg4[%c0_60, %c0_61] : memref<8x128xf32, #tpu.memory_space<vmem>>, vector<8x128xf32>
    tpu.vector_store %arg4[%c0_60, %c0_61], %156 {strides = array<i32>} : memref<8x128xf32, #tpu.memory_space<vmem>>, vector<8x128xf32>,
    %c0_62 = arith.constant 0 : index
    %c0_63 = arith.constant 0 : index
    %158 = vector.load %arg5[%c0_62, %c0_63] : memref<8x128xf32, #tpu.memory_space<vmem>>, vector<8x128xf32>
    tpu.vector_store %arg5[%c0_62, %c0_63], %154 {strides = array<i32>} : memref<8x128xf32, #tpu.memory_space<vmem>>, vector<8x128xf32>,
    %159 = arith.truncf %156 : vector<8x128xf32> to vector<8x128xbf16>
    %160 = arith.index_cast %c3_i32 : i32 to index
    %c0_64 = arith.constant 0 : index
    %c0_65 = arith.constant 0 : index
    %161 = vector.load %arg3[%160, %c0_64, %c0_65] : memref<8x8x128xbf16, #tpu.memory_space<vmem>>, vector<1x8x128xbf16>
    %162 = vector.shape_cast %161 : vector<1x8x128xbf16> to vector<8x128xbf16>
    %163 = vector.shape_cast %159 : vector<8x128xbf16> to vector<1x8x128xbf16>
    tpu.vector_store %arg3[%160, %c0_64, %c0_65], %163 {strides = array<i32>} : memref<8x8x128xbf16, #tpu.memory_space<vmem>>, vector<1x8x128xbf16>,
    %c4_i32 = arith.constant 4 : i32
    %c0_66 = arith.constant 0 : index
    %c0_67 = arith.constant 0 : index
    %164 = vector.load %arg4[%c0_66, %c0_67] : memref<8x128xf32, #tpu.memory_space<vmem>>, vector<8x128xf32>
    %c0_68 = arith.constant 0 : index
    %c0_69 = arith.constant 0 : index
    %165 = vector.load %arg5[%c0_68, %c0_69] : memref<8x128xf32, #tpu.memory_space<vmem>>, vector<8x128xf32>
    %166 = arith.index_cast %c4_i32 : i32 to index
    %c0_70 = arith.constant 0 : index
    %c0_71 = arith.constant 0 : index
    %167 = vector.load %arg1[%166, %c0_70, %c0_71] : memref<8x8x512xf32, #tpu.memory_space<vmem>>, vector<1x8x512xf32>
    %168 = vector.shape_cast %167 : vector<1x8x512xf32> to vector<8x512xf32>
    %169 = arith.truncf %164 : vector<8x128xf32> to vector<8x128xbf16>
    %cst_72 = arith.constant dense<0.000000e+00> : vector<8x512xf32>
    %170 = tpu.matmul %169, %3, %cst_72 {dimension_numbers = #tpu.dot_dimension_numbers<[1], [0], [0], [1], [0, 0, 1, 1], [], []>} : vector<8x128xbf16>, vector<128x512xbf16>, vector<8x512xf32> -> vector<8x512xf32>
    %171 = arith.addf %168, %170 : vector<8x512xf32>
    %172 = vector.extract_strided_slice %171 {offsets = [0, 0], sizes = [8, 128], strides = [1, 1]} : vector<8x512xf32> to vector<8x128xf32>
    %173 = arith.negf %172 : vector<8x128xf32>
    %174 = math.exp %173 : vector<8x128xf32>
    %cst_73 = arith.constant 1.000000e+00 : f32
    %175 = vector.broadcast %cst_73 : f32 to vector<8x128xf32>
    %176 = arith.addf %175, %174 : vector<8x128xf32>
    %177 = arith.divf %175, %176 : vector<8x128xf32>
    %178 = vector.extract_strided_slice %171 {offsets = [0, 128], sizes = [8, 128], strides = [1, 1]} : vector<8x512xf32> to vector<8x128xf32>
    %179 = arith.negf %178 : vector<8x128xf32>
    %180 = math.exp %179 : vector<8x128xf32>
    %cst_74 = arith.constant 1.000000e+00 : f32
    %181 = vector.broadcast %cst_74 : f32 to vector<8x128xf32>
    %182 = arith.addf %181, %180 : vector<8x128xf32>
    %183 = arith.divf %181, %182 : vector<8x128xf32>
    %184 = vector.extract_strided_slice %171 {offsets = [0, 256], sizes = [8, 128], strides = [1, 1]} : vector<8x512xf32> to vector<8x128xf32>
    %185 = math.tanh %184 : vector<8x128xf32>
    %186 = vector.extract_strided_slice %171 {offsets = [0, 384], sizes = [8, 128], strides = [1, 1]} : vector<8x512xf32> to vector<8x128xf32>
    %187 = arith.negf %186 : vector<8x128xf32>
    %188 = math.exp %187 : vector<8x128xf32>
    %cst_75 = arith.constant 1.000000e+00 : f32
    %189 = vector.broadcast %cst_75 : f32 to vector<8x128xf32>
    %190 = arith.addf %189, %188 : vector<8x128xf32>
    %191 = arith.divf %189, %190 : vector<8x128xf32>
    %192 = arith.mulf %183, %165 : vector<8x128xf32>
    %193 = arith.mulf %177, %185 : vector<8x128xf32>
    %194 = arith.addf %192, %193 : vector<8x128xf32>
    %195 = math.tanh %194 : vector<8x128xf32>
    %196 = arith.mulf %191, %195 : vector<8x128xf32>
    %c0_76 = arith.constant 0 : index
    %c0_77 = arith.constant 0 : index
    %197 = vector.load %arg4[%c0_76, %c0_77] : memref<8x128xf32, #tpu.memory_space<vmem>>, vector<8x128xf32>
    tpu.vector_store %arg4[%c0_76, %c0_77], %196 {strides = array<i32>} : memref<8x128xf32, #tpu.memory_space<vmem>>, vector<8x128xf32>,
    %c0_78 = arith.constant 0 : index
    %c0_79 = arith.constant 0 : index
    %198 = vector.load %arg5[%c0_78, %c0_79] : memref<8x128xf32, #tpu.memory_space<vmem>>, vector<8x128xf32>
    tpu.vector_store %arg5[%c0_78, %c0_79], %194 {strides = array<i32>} : memref<8x128xf32, #tpu.memory_space<vmem>>, vector<8x128xf32>,
    %199 = arith.truncf %196 : vector<8x128xf32> to vector<8x128xbf16>
    %200 = arith.index_cast %c4_i32 : i32 to index
    %c0_80 = arith.constant 0 : index
    %c0_81 = arith.constant 0 : index
    %201 = vector.load %arg3[%200, %c0_80, %c0_81] : memref<8x8x128xbf16, #tpu.memory_space<vmem>>, vector<1x8x128xbf16>
    %202 = vector.shape_cast %201 : vector<1x8x128xbf16> to vector<8x128xbf16>
    %203 = vector.shape_cast %199 : vector<8x128xbf16> to vector<1x8x128xbf16>
    tpu.vector_store %arg3[%200, %c0_80, %c0_81], %203 {strides = array<i32>} : memref<8x8x128xbf16, #tpu.memory_space<vmem>>, vector<1x8x128xbf16>,
    %c5_i32 = arith.constant 5 : i32
    %c0_82 = arith.constant 0 : index
    %c0_83 = arith.constant 0 : index
    %204 = vector.load %arg4[%c0_82, %c0_83] : memref<8x128xf32, #tpu.memory_space<vmem>>, vector<8x128xf32>
    %c0_84 = arith.constant 0 : index
    %c0_85 = arith.constant 0 : index
    %205 = vector.load %arg5[%c0_84, %c0_85] : memref<8x128xf32, #tpu.memory_space<vmem>>, vector<8x128xf32>
    %206 = arith.index_cast %c5_i32 : i32 to index
    %c0_86 = arith.constant 0 : index
    %c0_87 = arith.constant 0 : index
    %207 = vector.load %arg1[%206, %c0_86, %c0_87] : memref<8x8x512xf32, #tpu.memory_space<vmem>>, vector<1x8x512xf32>
    %208 = vector.shape_cast %207 : vector<1x8x512xf32> to vector<8x512xf32>
    %209 = arith.truncf %204 : vector<8x128xf32> to vector<8x128xbf16>
    %cst_88 = arith.constant dense<0.000000e+00> : vector<8x512xf32>
    %210 = tpu.matmul %209, %3, %cst_88 {dimension_numbers = #tpu.dot_dimension_numbers<[1], [0], [0], [1], [0, 0, 1, 1], [], []>} : vector<8x128xbf16>, vector<128x512xbf16>, vector<8x512xf32> -> vector<8x512xf32>
    %211 = arith.addf %208, %210 : vector<8x512xf32>
    %212 = vector.extract_strided_slice %211 {offsets = [0, 0], sizes = [8, 128], strides = [1, 1]} : vector<8x512xf32> to vector<8x128xf32>
    %213 = arith.negf %212 : vector<8x128xf32>
    %214 = math.exp %213 : vector<8x128xf32>
    %cst_89 = arith.constant 1.000000e+00 : f32
    %215 = vector.broadcast %cst_89 : f32 to vector<8x128xf32>
    %216 = arith.addf %215, %214 : vector<8x128xf32>
    %217 = arith.divf %215, %216 : vector<8x128xf32>
    %218 = vector.extract_strided_slice %211 {offsets = [0, 128], sizes = [8, 128], strides = [1, 1]} : vector<8x512xf32> to vector<8x128xf32>
    %219 = arith.negf %218 : vector<8x128xf32>
    %220 = math.exp %219 : vector<8x128xf32>
    %cst_90 = arith.constant 1.000000e+00 : f32
    %221 = vector.broadcast %cst_90 : f32 to vector<8x128xf32>
    %222 = arith.addf %221, %220 : vector<8x128xf32>
    %223 = arith.divf %221, %222 : vector<8x128xf32>
    %224 = vector.extract_strided_slice %211 {offsets = [0, 256], sizes = [8, 128], strides = [1, 1]} : vector<8x512xf32> to vector<8x128xf32>
    %225 = math.tanh %224 : vector<8x128xf32>
    %226 = vector.extract_strided_slice %211 {offsets = [0, 384], sizes = [8, 128], strides = [1, 1]} : vector<8x512xf32> to vector<8x128xf32>
    %227 = arith.negf %226 : vector<8x128xf32>
    %228 = math.exp %227 : vector<8x128xf32>
    %cst_91 = arith.constant 1.000000e+00 : f32
    %229 = vector.broadcast %cst_91 : f32 to vector<8x128xf32>
    %230 = arith.addf %229, %228 : vector<8x128xf32>
    %231 = arith.divf %229, %230 : vector<8x128xf32>
    %232 = arith.mulf %223, %205 : vector<8x128xf32>
    %233 = arith.mulf %217, %225 : vector<8x128xf32>
    %234 = arith.addf %232, %233 : vector<8x128xf32>
    %235 = math.tanh %234 : vector<8x128xf32>
    %236 = arith.mulf %231, %235 : vector<8x128xf32>
    %c0_92 = arith.constant 0 : index
    %c0_93 = arith.constant 0 : index
    %237 = vector.load %arg4[%c0_92, %c0_93] : memref<8x128xf32, #tpu.memory_space<vmem>>, vector<8x128xf32>
    tpu.vector_store %arg4[%c0_92, %c0_93], %236 {strides = array<i32>} : memref<8x128xf32, #tpu.memory_space<vmem>>, vector<8x128xf32>,
    %c0_94 = arith.constant 0 : index
    %c0_95 = arith.constant 0 : index
    %238 = vector.load %arg5[%c0_94, %c0_95] : memref<8x128xf32, #tpu.memory_space<vmem>>, vector<8x128xf32>
    tpu.vector_store %arg5[%c0_94, %c0_95], %234 {strides = array<i32>} : memref<8x128xf32, #tpu.memory_space<vmem>>, vector<8x128xf32>,
    %239 = arith.truncf %236 : vector<8x128xf32> to vector<8x128xbf16>
    %240 = arith.index_cast %c5_i32 : i32 to index
    %c0_96 = arith.constant 0 : index
    %c0_97 = arith.constant 0 : index
    %241 = vector.load %arg3[%240, %c0_96, %c0_97] : memref<8x8x128xbf16, #tpu.memory_space<vmem>>, vector<1x8x128xbf16>
    %242 = vector.shape_cast %241 : vector<1x8x128xbf16> to vector<8x128xbf16>
    %243 = vector.shape_cast %239 : vector<8x128xbf16> to vector<1x8x128xbf16>
    tpu.vector_store %arg3[%240, %c0_96, %c0_97], %243 {strides = array<i32>} : memref<8x8x128xbf16, #tpu.memory_space<vmem>>, vector<1x8x128xbf16>,
    %c6_i32 = arith.constant 6 : i32
    %c0_98 = arith.constant 0 : index
    %c0_99 = arith.constant 0 : index
    %244 = vector.load %arg4[%c0_98, %c0_99] : memref<8x128xf32, #tpu.memory_space<vmem>>, vector<8x128xf32>
    %c0_100 = arith.constant 0 : index
    %c0_101 = arith.constant 0 : index
    %245 = vector.load %arg5[%c0_100, %c0_101] : memref<8x128xf32, #tpu.memory_space<vmem>>, vector<8x128xf32>
    %246 = arith.index_cast %c6_i32 : i32 to index
    %c0_102 = arith.constant 0 : index
    %c0_103 = arith.constant 0 : index
    %247 = vector.load %arg1[%246, %c0_102, %c0_103] : memref<8x8x512xf32, #tpu.memory_space<vmem>>, vector<1x8x512xf32>
    %248 = vector.shape_cast %247 : vector<1x8x512xf32> to vector<8x512xf32>
    %249 = arith.truncf %244 : vector<8x128xf32> to vector<8x128xbf16>
    %cst_104 = arith.constant dense<0.000000e+00> : vector<8x512xf32>
    %250 = tpu.matmul %249, %3, %cst_104 {dimension_numbers = #tpu.dot_dimension_numbers<[1], [0], [0], [1], [0, 0, 1, 1], [], []>} : vector<8x128xbf16>, vector<128x512xbf16>, vector<8x512xf32> -> vector<8x512xf32>
    %251 = arith.addf %248, %250 : vector<8x512xf32>
    %252 = vector.extract_strided_slice %251 {offsets = [0, 0], sizes = [8, 128], strides = [1, 1]} : vector<8x512xf32> to vector<8x128xf32>
    %253 = arith.negf %252 : vector<8x128xf32>
    %254 = math.exp %253 : vector<8x128xf32>
    %cst_105 = arith.constant 1.000000e+00 : f32
    %255 = vector.broadcast %cst_105 : f32 to vector<8x128xf32>
    %256 = arith.addf %255, %254 : vector<8x128xf32>
    %257 = arith.divf %255, %256 : vector<8x128xf32>
    %258 = vector.extract_strided_slice %251 {offsets = [0, 128], sizes = [8, 128], strides = [1, 1]} : vector<8x512xf32> to vector<8x128xf32>
    %259 = arith.negf %258 : vector<8x128xf32>
    %260 = math.exp %259 : vector<8x128xf32>
    %cst_106 = arith.constant 1.000000e+00 : f32
    %261 = vector.broadcast %cst_106 : f32 to vector<8x128xf32>
    %262 = arith.addf %261, %260 : vector<8x128xf32>
    %263 = arith.divf %261, %262 : vector<8x128xf32>
    %264 = vector.extract_strided_slice %251 {offsets = [0, 256], sizes = [8, 128], strides = [1, 1]} : vector<8x512xf32> to vector<8x128xf32>
    %265 = math.tanh %264 : vector<8x128xf32>
    %266 = vector.extract_strided_slice %251 {offsets = [0, 384], sizes = [8, 128], strides = [1, 1]} : vector<8x512xf32> to vector<8x128xf32>
    %267 = arith.negf %266 : vector<8x128xf32>
    %268 = math.exp %267 : vector<8x128xf32>
    %cst_107 = arith.constant 1.000000e+00 : f32
    %269 = vector.broadcast %cst_107 : f32 to vector<8x128xf32>
    %270 = arith.addf %269, %268 : vector<8x128xf32>
    %271 = arith.divf %269, %270 : vector<8x128xf32>
    %272 = arith.mulf %263, %245 : vector<8x128xf32>
    %273 = arith.mulf %257, %265 : vector<8x128xf32>
    %274 = arith.addf %272, %273 : vector<8x128xf32>
    %275 = math.tanh %274 : vector<8x128xf32>
    %276 = arith.mulf %271, %275 : vector<8x128xf32>
    %c0_108 = arith.constant 0 : index
    %c0_109 = arith.constant 0 : index
    %277 = vector.load %arg4[%c0_108, %c0_109] : memref<8x128xf32, #tpu.memory_space<vmem>>, vector<8x128xf32>
    tpu.vector_store %arg4[%c0_108, %c0_109], %276 {strides = array<i32>} : memref<8x128xf32, #tpu.memory_space<vmem>>, vector<8x128xf32>,
    %c0_110 = arith.constant 0 : index
    %c0_111 = arith.constant 0 : index
    %278 = vector.load %arg5[%c0_110, %c0_111] : memref<8x128xf32, #tpu.memory_space<vmem>>, vector<8x128xf32>
    tpu.vector_store %arg5[%c0_110, %c0_111], %274 {strides = array<i32>} : memref<8x128xf32, #tpu.memory_space<vmem>>, vector<8x128xf32>,
    %279 = arith.truncf %276 : vector<8x128xf32> to vector<8x128xbf16>
    %280 = arith.index_cast %c6_i32 : i32 to index
    %c0_112 = arith.constant 0 : index
    %c0_113 = arith.constant 0 : index
    %281 = vector.load %arg3[%280, %c0_112, %c0_113] : memref<8x8x128xbf16, #tpu.memory_space<vmem>>, vector<1x8x128xbf16>
    %282 = vector.shape_cast %281 : vector<1x8x128xbf16> to vector<8x128xbf16>
    %283 = vector.shape_cast %279 : vector<8x128xbf16> to vector<1x8x128xbf16>
    tpu.vector_store %arg3[%280, %c0_112, %c0_113], %283 {strides = array<i32>} : memref<8x8x128xbf16, #tpu.memory_space<vmem>>, vector<1x8x128xbf16>,
    %c7_i32 = arith.constant 7 : i32
    %c0_114 = arith.constant 0 : index
    %c0_115 = arith.constant 0 : index
    %284 = vector.load %arg4[%c0_114, %c0_115] : memref<8x128xf32, #tpu.memory_space<vmem>>, vector<8x128xf32>
    %c0_116 = arith.constant 0 : index
    %c0_117 = arith.constant 0 : index
    %285 = vector.load %arg5[%c0_116, %c0_117] : memref<8x128xf32, #tpu.memory_space<vmem>>, vector<8x128xf32>
    %286 = arith.index_cast %c7_i32 : i32 to index
    %c0_118 = arith.constant 0 : index
    %c0_119 = arith.constant 0 : index
    %287 = vector.load %arg1[%286, %c0_118, %c0_119] : memref<8x8x512xf32, #tpu.memory_space<vmem>>, vector<1x8x512xf32>
    %288 = vector.shape_cast %287 : vector<1x8x512xf32> to vector<8x512xf32>
    %289 = arith.truncf %284 : vector<8x128xf32> to vector<8x128xbf16>
    %cst_120 = arith.constant dense<0.000000e+00> : vector<8x512xf32>
    %290 = tpu.matmul %289, %3, %cst_120 {dimension_numbers = #tpu.dot_dimension_numbers<[1], [0], [0], [1], [0, 0, 1, 1], [], []>} : vector<8x128xbf16>, vector<128x512xbf16>, vector<8x512xf32> -> vector<8x512xf32>
    %291 = arith.addf %288, %290 : vector<8x512xf32>
    %292 = vector.extract_strided_slice %291 {offsets = [0, 0], sizes = [8, 128], strides = [1, 1]} : vector<8x512xf32> to vector<8x128xf32>
    %293 = arith.negf %292 : vector<8x128xf32>
    %294 = math.exp %293 : vector<8x128xf32>
    %cst_121 = arith.constant 1.000000e+00 : f32
    %295 = vector.broadcast %cst_121 : f32 to vector<8x128xf32>
    %296 = arith.addf %295, %294 : vector<8x128xf32>
    %297 = arith.divf %295, %296 : vector<8x128xf32>
    %298 = vector.extract_strided_slice %291 {offsets = [0, 128], sizes = [8, 128], strides = [1, 1]} : vector<8x512xf32> to vector<8x128xf32>
    %299 = arith.negf %298 : vector<8x128xf32>
    %300 = math.exp %299 : vector<8x128xf32>
    %cst_122 = arith.constant 1.000000e+00 : f32
    %301 = vector.broadcast %cst_122 : f32 to vector<8x128xf32>
    %302 = arith.addf %301, %300 : vector<8x128xf32>
    %303 = arith.divf %301, %302 : vector<8x128xf32>
    %304 = vector.extract_strided_slice %291 {offsets = [0, 256], sizes = [8, 128], strides = [1, 1]} : vector<8x512xf32> to vector<8x128xf32>
    %305 = math.tanh %304 : vector<8x128xf32>
    %306 = vector.extract_strided_slice %291 {offsets = [0, 384], sizes = [8, 128], strides = [1, 1]} : vector<8x512xf32> to vector<8x128xf32>
    %307 = arith.negf %306 : vector<8x128xf32>
    %308 = math.exp %307 : vector<8x128xf32>
    %cst_123 = arith.constant 1.000000e+00 : f32
    %309 = vector.broadcast %cst_123 : f32 to vector<8x128xf32>
    %310 = arith.addf %309, %308 : vector<8x128xf32>
    %311 = arith.divf %309, %310 : vector<8x128xf32>
    %312 = arith.mulf %303, %285 : vector<8x128xf32>
    %313 = arith.mulf %297, %305 : vector<8x128xf32>
    %314 = arith.addf %312, %313 : vector<8x128xf32>
    %315 = math.tanh %314 : vector<8x128xf32>
    %316 = arith.mulf %311, %315 : vector<8x128xf32>
    %c0_124 = arith.constant 0 : index
    %c0_125 = arith.constant 0 : index
    %317 = vector.load %arg4[%c0_124, %c0_125] : memref<8x128xf32, #tpu.memory_space<vmem>>, vector<8x128xf32>
    tpu.vector_store %arg4[%c0_124, %c0_125], %316 {strides = array<i32>} : memref<8x128xf32, #tpu.memory_space<vmem>>, vector<8x128xf32>,
    %c0_126 = arith.constant 0 : index
    %c0_127 = arith.constant 0 : index
    %318 = vector.load %arg5[%c0_126, %c0_127] : memref<8x128xf32, #tpu.memory_space<vmem>>, vector<8x128xf32>
    tpu.vector_store %arg5[%c0_126, %c0_127], %314 {strides = array<i32>} : memref<8x128xf32, #tpu.memory_space<vmem>>, vector<8x128xf32>,
    %319 = arith.truncf %316 : vector<8x128xf32> to vector<8x128xbf16>
    %320 = arith.index_cast %c7_i32 : i32 to index
    %c0_128 = arith.constant 0 : index
    %c0_129 = arith.constant 0 : index
    %321 = vector.load %arg3[%320, %c0_128, %c0_129] : memref<8x8x128xbf16, #tpu.memory_space<vmem>>, vector<1x8x128xbf16>
    %322 = vector.shape_cast %321 : vector<1x8x128xbf16> to vector<8x128xbf16>
    %323 = vector.shape_cast %319 : vector<8x128xbf16> to vector<1x8x128xbf16>
    tpu.vector_store %arg3[%320, %c0_128, %c0_129], %323 {strides = array<i32>} : memref<8x8x128xbf16, #tpu.memory_space<vmem>>, vector<1x8x128xbf16>,
    %c8_i32 = arith.constant 8 : i32
    return
  }
  func.func @transform_0(%arg0: i32) -> (i32, i32, i32) {
    %c0_i32 = arith.constant 0 : i32
    %c0_i32_0 = arith.constant 0 : i32
    %c0_i32_1 = arith.constant 0 : i32
    return %arg0, %c0_i32, %c0_i32_0 : i32, i32, i32
  }
  func.func @transform_1(%arg0: i32) -> (i32, i32) {
    %c0_i32 = arith.constant 0 : i32
    %c0_i32_0 = arith.constant 0 : i32
    %c0_i32_1 = arith.constant 0 : i32
    return %c0_i32, %c0_i32_0 : i32, i32
  }
  func.func @transform_2(%arg0: i32) -> (i32, i32, i32) {
    %c0_i32 = arith.constant 0 : i32
    %c0_i32_0 = arith.constant 0 : i32
    %c0_i32_1 = arith.constant 0 : i32
    return %arg0, %c0_i32, %c0_i32_0 : i32, i32, i32
  }
}

</mosaic_0001>

<llo_original>
// kernel: decoder_rnn_forward.5
$region0: #{decoder_rnn_forward.5}
  #allocation0 [shape = 'u32[]', space=smem, size = 0x4, offset = 0x4, fixed_abs, tag = 'smem constant byte address 0x4 - core index']
  #allocation1 [shape = 'u32[144,128]{1,0:T(1,128)}', space=vmem, size = 0x12000, scoped, tag = 'internal scratch']
  #allocation2 [shape = 'f32[64,128]{1,0:T(8,128)}', space=vmem, size = 0x8000, scoped, tag = 'scratch operand']
  %s0 = inlined_call_operand.vmem [shape: bf16[64,128], index: 0, kind: input, shape index: {}]
  %s1 = inlined_call_operand.vmem [shape: bf16[128,128], index: 1, kind: input, shape index: {}]
  %s2 = inlined_call_operand.vmem [shape: f32[1,128], index: 2, kind: input, shape index: {}]
  %s3 = inlined_call_operand.vmem [shape: f32[64,128], index: 3, kind: output, shape index: {}]
  %s4 = sld [smem:[#allocation0]]
  $region30: #{decoder_rnn_forward.5} parent=0
    _
  %s6 = ssub.s32 1, %s4
  %s7 = scalar_select 0, %s6, %s4
  // Predicated region
  $region2: #{decoder_rnn_forward.5} parent=0 // pred_check
    _
  $region3: #{decoder_rnn_forward.5} parent=0 // pred_check_branch
    %9 = sbr.rel (0) target = $region5
  $region4: #{decoder_rnn_forward.5} parent=0 // pred_region
    _
  $region5: #{decoder_rnn_forward.5} parent=0 // pred_fallthru
    _
  // Predicated region
  $region6: #{decoder_rnn_forward.5} parent=0 // pred_check
    _
  $region7: #{decoder_rnn_forward.5} parent=0 // pred_check_branch
    %11 = sbr.rel (0) target = $region9
  $region8: #{decoder_rnn_forward.5} parent=0 // pred_region
    _
  $region9: #{decoder_rnn_forward.5} parent=0 // pred_fallthru
    _
  // Predicated region
  $region10: #{decoder_rnn_forward.5} parent=0 // pred_check
    _
  $region11: #{decoder_rnn_forward.5} parent=0 // pred_check_branch
    %13 = sbr.rel (0) target = $region13
  $region12: #{decoder_rnn_forward.5} parent=0 // pred_region
    _
  $region13: #{decoder_rnn_forward.5} parent=0 // pred_fallthru
    _
  %p15 = scmp.eq.s32.totalorder 0, 0
  // Predicated region
  $region14: #{decoder_rnn_forward.5} parent=0 // pred_check
    %p16 = pneg %p15
  $region15: #{decoder_rnn_forward.5} parent=0 // pred_check_branch
    %18 = sbr.rel (%p16) target = $region17
  $region16: #{decoder_rnn_forward.5} parent=0 // pred_region
    %19 = vst [vmem:[#allocation2] sm:$0xff] 0.0
    %20 = vst [vmem:[#allocation2 + $0x8] sm:$0xff] 0.0
    %21 = vst [vmem:[#allocation2 + $0x10] sm:$0xff] 0.0
    %22 = vst [vmem:[#allocation2 + $0x18] sm:$0xff] 0.0
    %23 = vst [vmem:[#allocation2 + $0x20] sm:$0xff] 0.0
    %24 = vst [vmem:[#allocation2 + $0x28] sm:$0xff] 0.0
    %25 = vst [vmem:[#allocation2 + $0x30] sm:$0xff] 0.0
    %26 = vst [vmem:[#allocation2 + $0x38] sm:$0xff] 0.0
  $region17: #{decoder_rnn_forward.5} parent=0 // pred_fallthru
    _
  %v27 = vld [vmem:[#allocation2] sm:$0xff]
  %v28 = vld [vmem:[#allocation2 + $0x8] sm:$0xff]
  %v29 = vld [vmem:[#allocation2 + $0x10] sm:$0xff]
  %v30 = vld [vmem:[#allocation2 + $0x18] sm:$0xff]
  %v31 = vld [vmem:[#allocation2 + $0x20] sm:$0xff]
  %v32 = vld [vmem:[#allocation2 + $0x28] sm:$0xff]
  %v33 = vld [vmem:[#allocation2 + $0x30] sm:$0xff]
  %v34 = vld [vmem:[#allocation2 + $0x38] sm:$0xff]
  %v35 = vld [vmem:[%s0] sm:$0xf]
  %v36 = vld [vmem:[%s0 + $0x4] sm:$0xf]
  %v37 = vld [vmem:[%s0 + $0x8] sm:$0xf]
  %v38 = vld [vmem:[%s0 + $0xc] sm:$0xf]
  %v39 = vld [vmem:[%s0 + $0x10] sm:$0xf]
  %v40 = vld [vmem:[%s0 + $0x14] sm:$0xf]
  %v41 = vld [vmem:[%s0 + $0x18] sm:$0xf]
  %v42 = vld [vmem:[%s0 + $0x1c] sm:$0xf]
  %v43 = vld [vmem:[%s1] sm:$0xf]
  %v44 = vld [vmem:[%s1 + $0x4] sm:$0xf]
  %v45 = vld [vmem:[%s1 + $0x8] sm:$0xf]
  %v46 = vld [vmem:[%s1 + $0xc] sm:$0xf]
  %v47 = vld [vmem:[%s1 + $0x10] sm:$0xf]
  %v48 = vld [vmem:[%s1 + $0x14] sm:$0xf]
  %v49 = vld [vmem:[%s1 + $0x18] sm:$0xf]
  %v50 = vld [vmem:[%s1 + $0x1c] sm:$0xf]
  %v51 = vld [vmem:[%s1 + $0x20] sm:$0xf]
  %v52 = vld [vmem:[%s1 + $0x24] sm:$0xf]
  %v53 = vld [vmem:[%s1 + $0x28] sm:$0xf]
  %v54 = vld [vmem:[%s1 + $0x2c] sm:$0xf]
  %v55 = vld [vmem:[%s1 + $0x30] sm:$0xf]
  %v56 = vld [vmem:[%s1 + $0x34] sm:$0xf]
  %v57 = vld [vmem:[%s1 + $0x38] sm:$0xf]
  %v58 = vld [vmem:[%s1 + $0x3c] sm:$0xf]
  %v67 = vunpack.c.l.b16 %v35
  %v68 = vunpack.c.l.b16 %v36
  %v69 = vunpack.c.l.b16 %v37
  %v70 = vunpack.c.l.b16 %v38
  %v71 = vunpack.c.l.b16 %v39
  %v72 = vunpack.c.l.b16 %v40
  %v73 = vunpack.c.l.b16 %v41
  %v74 = vunpack.c.l.b16 %v42
  %v75 = vpack.c.b16 %v68, %v67
  %v76 = vpack.c.b16 %v70, %v69
  %v77 = vpack.c.b16 %v72, %v71
  %v78 = vpack.c.b16 %v74, %v73
  %v99 = vunpack.c.l.b16 %v43
  %v100 = vunpack.c.l.b16 %v44
  %v101 = vunpack.c.l.b16 %v45
  %v102 = vunpack.c.l.b16 %v46
  %v103 = vunpack.c.l.b16 %v47
  %v104 = vunpack.c.l.b16 %v48
  %v105 = vunpack.c.l.b16 %v49
  %v106 = vunpack.c.l.b16 %v50
  %v107 = vunpack.c.l.b16 %v51
  %v108 = vunpack.c.l.b16 %v52
  %v109 = vunpack.c.l.b16 %v53
  %v110 = vunpack.c.l.b16 %v54
  %v111 = vunpack.c.l.b16 %v55
  %v112 = vunpack.c.l.b16 %v56
  %v113 = vunpack.c.l.b16 %v57
  %v114 = vunpack.c.l.b16 %v58
  %v115 = vpack.c.b16 %v100, %v99
  %v116 = vpack.c.b16 %v102, %v101
  %v117 = vpack.c.b16 %v104, %v103
  %v118 = vpack.c.b16 %v106, %v105
  %v119 = vpack.c.b16 %v108, %v107
  %v120 = vpack.c.b16 %v110, %v109
  %v121 = vpack.c.b16 %v112, %v111
  %v122 = vpack.c.b16 %v114, %v113
  %131 = vmatprep.subr.bf16.mxu0 0
  %132 = vmatpush1.bf16.msra.mxu0 %v115
  %133 = vmatprep.subr.bf16.mxu0 0
  %134 = vmatpush1.bf16.msra.mxu0 %v116
  %135 = vmatprep.subr.bf16.mxu0 0
  %136 = vmatpush1.bf16.msra.mxu0 %v117
  %137 = vmatprep.subr.bf16.mxu0 0
  %138 = vmatpush1.bf16.msra.mxu0 %v118
  %139 = vmatprep.subr.bf16.mxu0 0
  %140 = vmatpush1.bf16.msra.mxu0 %v119
  %141 = vmatprep.subr.bf16.mxu0 0
  %142 = vmatpush1.bf16.msra.mxu0 %v120
  %143 = vmatprep.subr.bf16.mxu0 0
  %144 = vmatpush1.bf16.msra.mxu0 %v121
  %145 = vmatprep.subr.bf16.mxu0 0
  %146 = vmatpush1.bf16.msra.mxu0 %v122
  %147 = vmatprep.subr.bf16.mxu0 0
  %148 = vmatpush1.bf16.msra.mxu0 0
  %149 = vmatprep.subr.bf16.mxu0 0
  %150 = vmatpush1.bf16.msra.mxu0 0
  %151 = vmatprep.subr.bf16.mxu0 0
  %152 = vmatpush1.bf16.msra.mxu0 0
  %153 = vmatprep.subr.bf16.mxu0 0
  %154 = vmatpush1.bf16.msra.mxu0 0
  %155 = vmatprep.subr.bf16.mxu0 0
  %156 = vmatpush1.bf16.msra.mxu0 0
  %157 = vmatprep.subr.bf16.mxu0 0
  %158 = vmatpush1.bf16.msra.mxu0 0
  %159 = vmatprep.subr.bf16.mxu0 0
  %160 = vmatpush1.bf16.msra.mxu0 0
  %161 = vmatprep.subr.bf16.mxu0 0
  %162 = vmatpush1.bf16.msra.mxu0 0
  %163 = vmatprep.mubr.bf16.mxu0 0
  %164 = vmatmul.mubr.bf16.gmra.mrb[0].mxu0 %v75
  %v165 = vpop.f32.mrb[0].mxu0
  %v166 = vadd.f32 0.0, %v165
  %v167 = vpop.f32.mrb[0].mxu0
  %v168 = vpop.f32.mrb[0].mxu0
  %v169 = vadd.f32 0.0, %v168
  %v170 = vpop.f32.mrb[0].mxu0
  %171 = vmatprep.mubr.bf16.mxu0 0
  %172 = vmatmul.mubr.bf16.gmra.mrb[0].mxu0 %v76
  %v173 = vpop.f32.mrb[0].mxu0
  %v174 = vadd.f32 0.0, %v173
  %v175 = vpop.f32.mrb[0].mxu0
  %v176 = vpop.f32.mrb[0].mxu0
  %v177 = vadd.f32 0.0, %v176
  %v178 = vpop.f32.mrb[0].mxu0
  %179 = vmatprep.mubr.bf16.mxu0 0
  %180 = vmatmul.mubr.bf16.gmra.mrb[0].mxu0 %v77
  %v181 = vpop.f32.mrb[0].mxu0
  %v182 = vadd.f32 0.0, %v181
  %v183 = vpop.f32.mrb[0].mxu0
  %v184 = vpop.f32.mrb[0].mxu0
  %v185 = vadd.f32 0.0, %v184
  %v186 = vpop.f32.mrb[0].mxu0
  %187 = vmatprep.mubr.bf16.mxu0 0
  %188 = vmatmul.mubr.bf16.gmra.mrb[0].mxu0 %v78
  %v189 = vpop.f32.mrb[0].mxu0
  %v190 = vadd.f32 0.0, %v189
  %v191 = vpop.f32.mrb[0].mxu0
  %v192 = vpop.f32.mrb[0].mxu0
  %v193 = vadd.f32 0.0, %v192
  %v194 = vpop.f32.mrb[0].mxu0
  %195 = vdwg.mxu0
  %v196 = vadd.f32 %v27, %v166
  %v197 = vadd.f32 %v28, %v169
  %v198 = vadd.f32 %v29, %v174
  %v199 = vadd.f32 %v30, %v177
  %v200 = vadd.f32 %v31, %v182
  %v201 = vadd.f32 %v32, %v185
  %v202 = vadd.f32 %v33, %v190
  %v203 = vadd.f32 %v34, %v193
  %204 = vst [vmem:[#allocation2] sm:$0xff] %v196
  %205 = vst [vmem:[#allocation2 + $0x8] sm:$0xff] %v197
  %206 = vst [vmem:[#allocation2 + $0x10] sm:$0xff] %v198
  %207 = vst [vmem:[#allocation2 + $0x18] sm:$0xff] %v199
  %208 = vst [vmem:[#allocation2 + $0x20] sm:$0xff] %v200
  %209 = vst [vmem:[#allocation2 + $0x28] sm:$0xff] %v201
  %210 = vst [vmem:[#allocation2 + $0x30] sm:$0xff] %v202
  %211 = vst [vmem:[#allocation2 + $0x38] sm:$0xff] %v203
  // Predicated region
  $region18: #{decoder_rnn_forward.5} parent=0 // pred_check
    %p212 = pneg %p15
  $region19: #{decoder_rnn_forward.5} parent=0 // pred_check_branch
    %214 = sbr.rel (%p212) target = $region21
  $region20: #{decoder_rnn_forward.5} parent=0 // pred_region
    %v215 = vld [vmem:[#allocation2] sm:$0xff]
    %v216 = vld [vmem:[#allocation2 + $0x8] sm:$0xff]
    %v217 = vld [vmem:[#allocation2 + $0x10] sm:$0xff]
    %v218 = vld [vmem:[#allocation2 + $0x18] sm:$0xff]
    %v219 = vld [vmem:[#allocation2 + $0x20] sm:$0xff]
    %v220 = vld [vmem:[#allocation2 + $0x28] sm:$0xff]
    %v221 = vld [vmem:[#allocation2 + $0x30] sm:$0xff]
    %v222 = vld [vmem:[#allocation2 + $0x38] sm:$0xff]
    %v223 = vld [vmem:[%s2] sm:$0x1]
    %v225 = vlaneseq
    %v226 = vshrl.u32 %v225, 7
    %v227 = vsub.s32 0, %v226
    %v228 = vrot.slane %v223, %v227
    %v230 = vadd.f32 %v215, %v228
    %v231 = vadd.f32 %v216, %v228
    %v232 = vadd.f32 %v217, %v228
    %v233 = vadd.f32 %v218, %v228
    %v234 = vadd.f32 %v219, %v228
    %v235 = vadd.f32 %v220, %v228
    %v236 = vadd.f32 %v221, %v228
    %v237 = vadd.f32 %v222, %v228
    %238 = vst [vmem:[%s3] sm:$0xff] %v230
    %239 = vst [vmem:[%s3 + $0x8] sm:$0xff] %v231
    %240 = vst [vmem:[%s3 + $0x10] sm:$0xff] %v232
    %241 = vst [vmem:[%s3 + $0x18] sm:$0xff] %v233
    %242 = vst [vmem:[%s3 + $0x20] sm:$0xff] %v234
    %243 = vst [vmem:[%s3 + $0x28] sm:$0xff] %v235
    %244 = vst [vmem:[%s3 + $0x30] sm:$0xff] %v236
    %245 = vst [vmem:[%s3 + $0x38] sm:$0xff] %v237
  $region21: #{decoder_rnn_forward.5} parent=0 // pred_fallthru
    _
  // Predicated region
  $region22: #{decoder_rnn_forward.5} parent=0 // pred_check
    _
  $region23: #{decoder_rnn_forward.5} parent=0 // pred_check_branch
    %247 = sbr.rel (0) target = $region25
  $region24: #{decoder_rnn_forward.5} parent=0 // pred_region
    _
  $region25: #{decoder_rnn_forward.5} parent=0 // pred_fallthru
    _
  // Predicated region
  $region26: #{decoder_rnn_forward.5} parent=0 // pred_check
    _
  $region27: #{decoder_rnn_forward.5} parent=0 // pred_check_branch
    %249 = sbr.rel (0) target = $region29
  $region28: #{decoder_rnn_forward.5} parent=0 // pred_region
    _
  $region29: #{decoder_rnn_forward.5} parent=0 // pred_fallthru
    _

// kernel: decoder_rnn_forward.3
$region0: #{decoder_rnn_forward.3}
  #allocation0 [shape = 'u32[]', space=smem, size = 0x4, offset = 0x4, fixed_abs, tag = 'smem constant byte address 0x4 - core index']
  #allocation1 [shape = 'u32[144,128]{1,0:T(1,128)}', space=vmem, size = 0x12000, scoped, tag = 'internal scratch']
  #allocation2 [shape = 'f32[64,512]{1,0:T(8,128)}', space=vmem, size = 0x20000, scoped, tag = 'scratch operand']
  %s0 = inlined_call_operand.vmem [shape: bf16[64,128], index: 0, kind: input, shape index: {}]
  %s1 = inlined_call_operand.vmem [shape: bf16[128,512], index: 1, kind: input, shape index: {}]
  %s2 = inlined_call_operand.vmem [shape: f32[1,512], index: 2, kind: input, shape index: {}]
  %s3 = inlined_call_operand.vmem [shape: f32[64,512], index: 3, kind: output, shape index: {}]
  %s4 = sld [smem:[#allocation0]]
  $region30: #{decoder_rnn_forward.3} parent=0
    _
  %s6 = ssub.s32 1, %s4
  %s7 = scalar_select 0, %s6, %s4
  // Predicated region
  $region2: #{decoder_rnn_forward.3} parent=0 // pred_check
    _
  $region3: #{decoder_rnn_forward.3} parent=0 // pred_check_branch
    %9 = sbr.rel (0) target = $region5
  $region4: #{decoder_rnn_forward.3} parent=0 // pred_region
    _
  $region5: #{decoder_rnn_forward.3} parent=0 // pred_fallthru
    _
  // Predicated region
  $region6: #{decoder_rnn_forward.3} parent=0 // pred_check
    _
  $region7: #{decoder_rnn_forward.3} parent=0 // pred_check_branch
    %11 = sbr.rel (0) target = $region9
  $region8: #{decoder_rnn_forward.3} parent=0 // pred_region
    _
  $region9: #{decoder_rnn_forward.3} parent=0 // pred_fallthru
    _
  // Predicated region
  $region10: #{decoder_rnn_forward.3} parent=0 // pred_check
    _
  $region11: #{decoder_rnn_forward.3} parent=0 // pred_check_branch
    %13 = sbr.rel (0) target = $region13
  $region12: #{decoder_rnn_forward.3} parent=0 // pred_region
    _
  $region13: #{decoder_rnn_forward.3} parent=0 // pred_fallthru
    _
  %p15 = scmp.eq.s32.totalorder 0, 0
  // Predicated region
  $region14: #{decoder_rnn_forward.3} parent=0 // pred_check
    %p16 = pneg %p15
  $region15: #{decoder_rnn_forward.3} parent=0 // pred_check_branch
    %18 = sbr.rel (%p16) target = $region17
  $region16: #{decoder_rnn_forward.3} parent=0 // pred_region
    %19 = vst [vmem:[#allocation2] sm:$0xff] 0.0
    %20 = vst [vmem:[#allocation2 + $0x8] sm:$0xff] 0.0
    %21 = vst [vmem:[#allocation2 + $0x10] sm:$0xff] 0.0
    %22 = vst [vmem:[#allocation2 + $0x18] sm:$0xff] 0.0
    %23 = vst [vmem:[#allocation2 + $0x20] sm:$0xff] 0.0
    %24 = vst [vmem:[#allocation2 + $0x28] sm:$0xff] 0.0
    %25 = vst [vmem:[#allocation2 + $0x30] sm:$0xff] 0.0
    %26 = vst [vmem:[#allocation2 + $0x38] sm:$0xff] 0.0
    %27 = vst [vmem:[#allocation2 + $0x40] sm:$0xff] 0.0
    %28 = vst [vmem:[#allocation2 + $0x48] sm:$0xff] 0.0
    %29 = vst [vmem:[#allocation2 + $0x50] sm:$0xff] 0.0
    %30 = vst [vmem:[#allocation2 + $0x58] sm:$0xff] 0.0
    %31 = vst [vmem:[#allocation2 + $0x60] sm:$0xff] 0.0
    %32 = vst [vmem:[#allocation2 + $0x68] sm:$0xff] 0.0
    %33 = vst [vmem:[#allocation2 + $0x70] sm:$0xff] 0.0
    %34 = vst [vmem:[#allocation2 + $0x78] sm:$0xff] 0.0
    %35 = vst [vmem:[#allocation2 + $0x80] sm:$0xff] 0.0
    %36 = vst [vmem:[#allocation2 + $0x88] sm:$0xff] 0.0
    %37 = vst [vmem:[#allocation2 + $0x90] sm:$0xff] 0.0
    %38 = vst [vmem:[#allocation2 + $0x98] sm:$0xff] 0.0
    %39 = vst [vmem:[#allocation2 + $0xa0] sm:$0xff] 0.0
    %40 = vst [vmem:[#allocation2 + $0xa8] sm:$0xff] 0.0
    %41 = vst [vmem:[#allocation2 + $0xb0] sm:$0xff] 0.0
    %42 = vst [vmem:[#allocation2 + $0xb8] sm:$0xff] 0.0
    %43 = vst [vmem:[#allocation2 + $0xc0] sm:$0xff] 0.0
    %44 = vst [vmem:[#allocation2 + $0xc8] sm:$0xff] 0.0
    %45 = vst [vmem:[#allocation2 + $0xd0] sm:$0xff] 0.0
    %46 = vst [vmem:[#allocation2 + $0xd8] sm:$0xff] 0.0
    %47 = vst [vmem:[#allocation2 + $0xe0] sm:$0xff] 0.0
    %48 = vst [vmem:[#allocation2 + $0xe8] sm:$0xff] 0.0
    %49 = vst [vmem:[#allocation2 + $0xf0] sm:$0xff] 0.0
    %50 = vst [vmem:[#allocation2 + $0xf8] sm:$0xff] 0.0
  $region17: #{decoder_rnn_forward.3} parent=0 // pred_fallthru
    _
  %v51 = vld [vmem:[#allocation2] sm:$0xff]
  %v52 = vld [vmem:[#allocation2 + $0x8] sm:$0xff]
  %v53 = vld [vmem:[#allocation2 + $0x10] sm:$0xff]
  %v54 = vld [vmem:[#allocation2 + $0x18] sm:$0xff]
  %v55 = vld [vmem:[#allocation2 + $0x20] sm:$0xff]
  %v56 = vld [vmem:[#allocation2 + $0x28] sm:$0xff]
  %v57 = vld [vmem:[#allocation2 + $0x30] sm:$0xff]
  %v58 = vld [vmem:[#allocation2 + $0x38] sm:$0xff]
  %v59 = vld [vmem:[#allocation2 + $0x40] sm:$0xff]
  %v60 = vld [vmem:[#allocation2 + $0x48] sm:$0xff]
  %v61 = vld [vmem:[#allocation2 + $0x50] sm:$0xff]
  %v62 = vld [vmem:[#allocation2 + $0x58] sm:$0xff]
  %v63 = vld [vmem:[#allocation2 + $0x60] sm:$0xff]
  %v64 = vld [vmem:[#allocation2 + $0x68] sm:$0xff]
  %v65 = vld [vmem:[#allocation2 + $0x70] sm:$0xff]
  %v66 = vld [vmem:[#allocation2 + $0x78] sm:$0xff]
  %v67 = vld [vmem:[#allocation2 + $0x80] sm:$0xff]
  %v68 = vld [vmem:[#allocation2 + $0x88] sm:$0xff]
  %v69 = vld [vmem:[#allocation2 + $0x90] sm:$0xff]
  %v70 = vld [vmem:[#allocation2 + $0x98] sm:$0xff]
  %v71 = vld [vmem:[#allocation2 + $0xa0] sm:$0xff]
  %v72 = vld [vmem:[#allocation2 + $0xa8] sm:$0xff]
  %v73 = vld [vmem:[#allocation2 + $0xb0] sm:$0xff]
  %v74 = vld [vmem:[#allocation2 + $0xb8] sm:$0xff]
  %v75 = vld [vmem:[#allocation2 + $0xc0] sm:$0xff]
  %v76 = vld [vmem:[#allocation2 + $0xc8] sm:$0xff]
  %v77 = vld [vmem:[#allocation2 + $0xd0] sm:$0xff]
  %v78 = vld [vmem:[#allocation2 + $0xd8] sm:$0xff]
  %v79 = vld [vmem:[#allocation2 + $0xe0] sm:$0xff]
  %v80 = vld [vmem:[#allocation2 + $0xe8] sm:$0xff]
  %v81 = vld [vmem:[#allocation2 + $0xf0] sm:$0xff]
  %v82 = vld [vmem:[#allocation2 + $0xf8] sm:$0xff]
  %v83 = vld [vmem:[%s0] sm:$0xf]
  %v84 = vld [vmem:[%s0 + $0x4] sm:$0xf]
  %v85 = vld [vmem:[%s0 + $0x8] sm:$0xf]
  %v86 = vld [vmem:[%s0 + $0xc] sm:$0xf]
  %v87 = vld [vmem:[%s0 + $0x10] sm:$0xf]
  %v88 = vld [vmem:[%s0 + $0x14] sm:$0xf]
  %v89 = vld [vmem:[%s0 + $0x18] sm:$0xf]
  %v90 = vld [vmem:[%s0 + $0x1c] sm:$0xf]
  %v91 = vld [vmem:[%s1] sm:$0xff]
  %v92 = vld [vmem:[%s1 + $0x8] sm:$0xff]
  %v93 = vld [vmem:[%s1 + $0x10] sm:$0xff]
  %v94 = vld [vmem:[%s1 + $0x18] sm:$0xff]
  %v95 = vld [vmem:[%s1 + $0x20] sm:$0xff]
  %v96 = vld [vmem:[%s1 + $0x28] sm:$0xff]
  %v97 = vld [vmem:[%s1 + $0x30] sm:$0xff]
  %v98 = vld [vmem:[%s1 + $0x38] sm:$0xff]
  %v99 = vld [vmem:[%s1 + $0x40] sm:$0xff]
  %v100 = vld [vmem:[%s1 + $0x48] sm:$0xff]
  %v101 = vld [vmem:[%s1 + $0x50] sm:$0xff]
  %v102 = vld [vmem:[%s1 + $0x58] sm:$0xff]
  %v103 = vld [vmem:[%s1 + $0x60] sm:$0xff]
  %v104 = vld [vmem:[%s1 + $0x68] sm:$0xff]
  %v105 = vld [vmem:[%s1 + $0x70] sm:$0xff]
  %v106 = vld [vmem:[%s1 + $0x78] sm:$0xff]
  %v107 = vld [vmem:[%s1 + $0x80] sm:$0xff]
  %v108 = vld [vmem:[%s1 + $0x88] sm:$0xff]
  %v109 = vld [vmem:[%s1 + $0x90] sm:$0xff]
  %v110 = vld [vmem:[%s1 + $0x98] sm:$0xff]
  %v111 = vld [vmem:[%s1 + $0xa0] sm:$0xff]
  %v112 = vld [vmem:[%s1 + $0xa8] sm:$0xff]
  %v113 = vld [vmem:[%s1 + $0xb0] sm:$0xff]
  %v114 = vld [vmem:[%s1 + $0xb8] sm:$0xff]
  %v115 = vld [vmem:[%s1 + $0xc0] sm:$0xff]
  %v116 = vld [vmem:[%s1 + $0xc8] sm:$0xff]
  %v117 = vld [vmem:[%s1 + $0xd0] sm:$0xff]
  %v118 = vld [vmem:[%s1 + $0xd8] sm:$0xff]
  %v119 = vld [vmem:[%s1 + $0xe0] sm:$0xff]
  %v120 = vld [vmem:[%s1 + $0xe8] sm:$0xff]
  %v121 = vld [vmem:[%s1 + $0xf0] sm:$0xff]
  %v122 = vld [vmem:[%s1 + $0xf8] sm:$0xff]
  %v131 = vunpack.c.l.b16 %v83
  %v132 = vunpack.c.l.b16 %v84
  %v133 = vunpack.c.l.b16 %v85
  %v134 = vunpack.c.l.b16 %v86
  %v135 = vunpack.c.l.b16 %v87
  %v136 = vunpack.c.l.b16 %v88
  %v137 = vunpack.c.l.b16 %v89
  %v138 = vunpack.c.l.b16 %v90
  %v139 = vpack.c.b16 %v132, %v131
  %v140 = vpack.c.b16 %v134, %v133
  %v141 = vpack.c.b16 %v136, %v135
  %v142 = vpack.c.b16 %v138, %v137
  %v179 = vunpack.c.l.b16 %v91
  %v180 = vunpack.c.h.b16 %v91
  %v181 = vunpack.c.l.b16 %v92
  %v182 = vunpack.c.h.b16 %v92
  %v183 = vunpack.c.l.b16 %v93
  %v184 = vunpack.c.h.b16 %v93
  %v185 = vunpack.c.l.b16 %v94
  %v186 = vunpack.c.h.b16 %v94
  %v187 = vunpack.c.l.b16 %v95
  %v188 = vunpack.c.h.b16 %v95
  %v189 = vunpack.c.l.b16 %v96
  %v190 = vunpack.c.h.b16 %v96
  %v191 = vunpack.c.l.b16 %v97
  %v192 = vunpack.c.h.b16 %v97
  %v193 = vunpack.c.l.b16 %v98
  %v194 = vunpack.c.h.b16 %v98
  %v195 = vunpack.c.l.b16 %v99
  %v196 = vunpack.c.h.b16 %v99
  %v197 = vunpack.c.l.b16 %v100
  %v198 = vunpack.c.h.b16 %v100
  %v199 = vunpack.c.l.b16 %v101
  %v200 = vunpack.c.h.b16 %v101
  %v201 = vunpack.c.l.b16 %v102
  %v202 = vunpack.c.h.b16 %v102
  %v203 = vunpack.c.l.b16 %v103
  %v204 = vunpack.c.h.b16 %v103
  %v205 = vunpack.c.l.b16 %v104
  %v206 = vunpack.c.h.b16 %v104
  %v207 = vunpack.c.l.b16 %v105
  %v208 = vunpack.c.h.b16 %v105
  %v209 = vunpack.c.l.b16 %v106
  %v210 = vunpack.c.h.b16 %v106
  %v211 = vunpack.c.l.b16 %v107
  %v212 = vunpack.c.h.b16 %v107
  %v213 = vunpack.c.l.b16 %v108
  %v214 = vunpack.c.h.b16 %v108
  %v215 = vunpack.c.l.b16 %v109
  %v216 = vunpack.c.h.b16 %v109
  %v217 = vunpack.c.l.b16 %v110
  %v218 = vunpack.c.h.b16 %v110
  %v219 = vunpack.c.l.b16 %v111
  %v220 = vunpack.c.h.b16 %v111
  %v221 = vunpack.c.l.b16 %v112
  %v222 = vunpack.c.h.b16 %v112
  %v223 = vunpack.c.l.b16 %v113
  %v224 = vunpack.c.h.b16 %v113
  %v225 = vunpack.c.l.b16 %v114
  %v226 = vunpack.c.h.b16 %v114
  %v227 = vunpack.c.l.b16 %v115
  %v228 = vunpack.c.h.b16 %v115
  %v229 = vunpack.c.l.b16 %v116
  %v230 = vunpack.c.h.b16 %v116
  %v231 = vunpack.c.l.b16 %v117
  %v232 = vunpack.c.h.b16 %v117
  %v233 = vunpack.c.l.b16 %v118
  %v234 = vunpack.c.h.b16 %v118
  %v235 = vunpack.c.l.b16 %v119
  %v236 = vunpack.c.h.b16 %v119
  %v237 = vunpack.c.l.b16 %v120
  %v238 = vunpack.c.h.b16 %v120
  %v239 = vunpack.c.l.b16 %v121
  %v240 = vunpack.c.h.b16 %v121
  %v241 = vunpack.c.l.b16 %v122
  %v242 = vunpack.c.h.b16 %v122
  %v243 = vpack.c.b16 %v183, %v179
  %v244 = vpack.c.b16 %v184, %v180
  %v245 = vpack.c.b16 %v185, %v181
  %v246 = vpack.c.b16 %v186, %v182
  %v247 = vpack.c.b16 %v191, %v187
  %v248 = vpack.c.b16 %v192, %v188
  %v249 = vpack.c.b16 %v193, %v189
  %v250 = vpack.c.b16 %v194, %v190
  %v251 = vpack.c.b16 %v199, %v195
  %v252 = vpack.c.b16 %v200, %v196
  %v253 = vpack.c.b16 %v201, %v197
  %v254 = vpack.c.b16 %v202, %v198
  %v255 = vpack.c.b16 %v207, %v203
  %v256 = vpack.c.b16 %v208, %v204
  %v257 = vpack.c.b16 %v209, %v205
  %v258 = vpack.c.b16 %v210, %v206
  %v259 = vpack.c.b16 %v215, %v211
  %v260 = vpack.c.b16 %v216, %v212
  %v261 = vpack.c.b16 %v217, %v213
  %v262 = vpack.c.b16 %v218, %v214
  %v263 = vpack.c.b16 %v223, %v219
  %v264 = vpack.c.b16 %v224, %v220
  %v265 = vpack.c.b16 %v225, %v221
  %v266 = vpack.c.b16 %v226, %v222
  %v267 = vpack.c.b16 %v231, %v227
  %v268 = vpack.c.b16 %v232, %v228
  %v269 = vpack.c.b16 %v233, %v229
  %v270 = vpack.c.b16 %v234, %v230
  %v271 = vpack.c.b16 %v239, %v235
  %v272 = vpack.c.b16 %v240, %v236
  %v273 = vpack.c.b16 %v241, %v237
  %v274 = vpack.c.b16 %v242, %v238
  %307 = vmatprep.subr.bf16.mxu0 %v244
  %308 = vmatpush1.bf16.msra.mxu0 %v243
  %309 = vmatprep.subr.bf16.mxu0 %v248
  %310 = vmatpush1.bf16.msra.mxu0 %v247
  %311 = vmatprep.subr.bf16.mxu0 %v252
  %312 = vmatpush1.bf16.msra.mxu0 %v251
  %313 = vmatprep.subr.bf16.mxu0 %v256
  %314 = vmatpush1.bf16.msra.mxu0 %v255
  %315 = vmatprep.subr.bf16.mxu0 %v260
  %316 = vmatpush1.bf16.msra.mxu0 %v259
  %317 = vmatprep.subr.bf16.mxu0 %v264
  %318 = vmatpush1.bf16.msra.mxu0 %v263
  %319 = vmatprep.subr.bf16.mxu0 %v268
  %320 = vmatpush1.bf16.msra.mxu0 %v267
  %321 = vmatprep.subr.bf16.mxu0 %v272
  %322 = vmatpush1.bf16.msra.mxu0 %v271
  %323 = vmatprep.subr.bf16.mxu0 0
  %324 = vmatpush1.bf16.msra.mxu0 0
  %325 = vmatprep.subr.bf16.mxu0 0
  %326 = vmatpush1.bf16.msra.mxu0 0
  %327 = vmatprep.subr.bf16.mxu0 0
  %328 = vmatpush1.bf16.msra.mxu0 0
  %329 = vmatprep.subr.bf16.mxu0 0
  %330 = vmatpush1.bf16.msra.mxu0 0
  %331 = vmatprep.subr.bf16.mxu0 0
  %332 = vmatpush1.bf16.msra.mxu0 0
  %333 = vmatprep.subr.bf16.mxu0 0
  %334 = vmatpush1.bf16.msra.mxu0 0
  %335 = vmatprep.subr.bf16.mxu0 0
  %336 = vmatpush1.bf16.msra.mxu0 0
  %337 = vmatprep.subr.bf16.mxu0 0
  %338 = vmatpush1.bf16.msra.mxu0 0
  %339 = vmatprep.mubr.bf16.mxu0 0
  %340 = vmatmul.mubr.bf16.gmra.mrb[0].mxu0 %v139
  %v341 = vpop.f32.mrb[0].mxu0
  %v342 = vadd.f32 0.0, %v341
  %v343 = vpop.f32.mrb[0].mxu0
  %v344 = vadd.f32 0.0, %v343
  %v345 = vpop.f32.mrb[0].mxu0
  %v346 = vadd.f32 0.0, %v345
  %v347 = vpop.f32.mrb[0].mxu0
  %v348 = vadd.f32 0.0, %v347
  %349 = vmatprep.mubr.bf16.mxu0 0
  %350 = vmatmul.mubr.bf16.gmra.mrb[0].mxu0 %v140
  %v351 = vpop.f32.mrb[0].mxu0
  %v352 = vadd.f32 0.0, %v351
  %v353 = vpop.f32.mrb[0].mxu0
  %v354 = vadd.f32 0.0, %v353
  %v355 = vpop.f32.mrb[0].mxu0
  %v356 = vadd.f32 0.0, %v355
  %v357 = vpop.f32.mrb[0].mxu0
  %v358 = vadd.f32 0.0, %v357
  %359 = vmatprep.mubr.bf16.mxu0 0
  %360 = vmatmul.mubr.bf16.gmra.mrb[0].mxu0 %v141
  %v361 = vpop.f32.mrb[0].mxu0
  %v362 = vadd.f32 0.0, %v361
  %v363 = vpop.f32.mrb[0].mxu0
  %v364 = vadd.f32 0.0, %v363
  %v365 = vpop.f32.mrb[0].mxu0
  %v366 = vadd.f32 0.0, %v365
  %v367 = vpop.f32.mrb[0].mxu0
  %v368 = vadd.f32 0.0, %v367
  %369 = vmatprep.mubr.bf16.mxu0 0
  %370 = vmatmul.mubr.bf16.gmra.mrb[0].mxu0 %v142
  %v371 = vpop.f32.mrb[0].mxu0
  %v372 = vadd.f32 0.0, %v371
  %v373 = vpop.f32.mrb[0].mxu0
  %v374 = vadd.f32 0.0, %v373
  %v375 = vpop.f32.mrb[0].mxu0
  %v376 = vadd.f32 0.0, %v375
  %v377 = vpop.f32.mrb[0].mxu0
  %v378 = vadd.f32 0.0, %v377
  %379 = vdwg.mxu0
  %380 = vmatprep.subr.bf16.mxu0 %v246
  %381 = vmatpush1.bf16.msra.mxu0 %v245
  %382 = vmatprep.subr.bf16.mxu0 %v250
  %383 = vmatpush1.bf16.msra.mxu0 %v249
  %384 = vmatprep.subr.bf16.mxu0 %v254
  %385 = vmatpush1.bf16.msra.mxu0 %v253
  %386 = vmatprep.subr.bf16.mxu0 %v258
  %387 = vmatpush1.bf16.msra.mxu0 %v257
  %388 = vmatprep.subr.bf16.mxu0 %v262
  %389 = vmatpush1.bf16.msra.mxu0 %v261
  %390 = vmatprep.subr.bf16.mxu0 %v266
  %391 = vmatpush1.bf16.msra.mxu0 %v265
  %392 = vmatprep.subr.bf16.mxu0 %v270
  %393 = vmatpush1.bf16.msra.mxu0 %v269
  %394 = vmatprep.subr.bf16.mxu0 %v274
  %395 = vmatpush1.bf16.msra.mxu0 %v273
  %396 = vmatprep.subr.bf16.mxu0 0
  %397 = vmatpush1.bf16.msra.mxu0 0
  %398 = vmatprep.subr.bf16.mxu0 0
  %399 = vmatpush1.bf16.msra.mxu0 0
  %400 = vmatprep.subr.bf16.mxu0 0
  %401 = vmatpush1.bf16.msra.mxu0 0
  %402 = vmatprep.subr.bf16.mxu0 0
  %403 = vmatpush1.bf16.msra.mxu0 0
  %404 = vmatprep.subr.bf16.mxu0 0
  %405 = vmatpush1.bf16.msra.mxu0 0
  %406 = vmatprep.subr.bf16.mxu0 0
  %407 = vmatpush1.bf16.msra.mxu0 0
  %408 = vmatprep.subr.bf16.mxu0 0
  %409 = vmatpush1.bf16.msra.mxu0 0
  %410 = vmatprep.subr.bf16.mxu0 0
  %411 = vmatpush1.bf16.msra.mxu0 0
  %412 = vmatprep.mubr.bf16.mxu0 0
  %413 = vmatmul.mubr.bf16.gmra.mrb[0].mxu0 %v139
  %v414 = vpop.f32.mrb[0].mxu0
  %v415 = vadd.f32 0.0, %v414
  %v416 = vpop.f32.mrb[0].mxu0
  %v417 = vadd.f32 0.0, %v416
  %v418 = vpop.f32.mrb[0].mxu0
  %v419 = vadd.f32 0.0, %v418
  %v420 = vpop.f32.mrb[0].mxu0
  %v421 = vadd.f32 0.0, %v420
  %422 = vmatprep.mubr.bf16.mxu0 0
  %423 = vmatmul.mubr.bf16.gmra.mrb[0].mxu0 %v140
  %v424 = vpop.f32.mrb[0].mxu0
  %v425 = vadd.f32 0.0, %v424
  %v426 = vpop.f32.mrb[0].mxu0
  %v427 = vadd.f32 0.0, %v426
  %v428 = vpop.f32.mrb[0].mxu0
  %v429 = vadd.f32 0.0, %v428
  %v430 = vpop.f32.mrb[0].mxu0
  %v431 = vadd.f32 0.0, %v430
  %432 = vmatprep.mubr.bf16.mxu0 0
  %433 = vmatmul.mubr.bf16.gmra.mrb[0].mxu0 %v141
  %v434 = vpop.f32.mrb[0].mxu0
  %v435 = vadd.f32 0.0, %v434
  %v436 = vpop.f32.mrb[0].mxu0
  %v437 = vadd.f32 0.0, %v436
  %v438 = vpop.f32.mrb[0].mxu0
  %v439 = vadd.f32 0.0, %v438
  %v440 = vpop.f32.mrb[0].mxu0
  %v441 = vadd.f32 0.0, %v440
  %442 = vmatprep.mubr.bf16.mxu0 0
  %443 = vmatmul.mubr.bf16.gmra.mrb[0].mxu0 %v142
  %v444 = vpop.f32.mrb[0].mxu0
  %v445 = vadd.f32 0.0, %v444
  %v446 = vpop.f32.mrb[0].mxu0
  %v447 = vadd.f32 0.0, %v446
  %v448 = vpop.f32.mrb[0].mxu0
  %v449 = vadd.f32 0.0, %v448
  %v450 = vpop.f32.mrb[0].mxu0
  %v451 = vadd.f32 0.0, %v450
  %452 = vdwg.mxu0
  %v453 = vadd.f32 %v51, %v342
  %v454 = vadd.f32 %v52, %v344
  %v455 = vadd.f32 %v53, %v415
  %v456 = vadd.f32 %v54, %v417
  %v457 = vadd.f32 %v55, %v346
  %v458 = vadd.f32 %v56, %v348
  %v459 = vadd.f32 %v57, %v419
  %v460 = vadd.f32 %v58, %v421
  %v461 = vadd.f32 %v59, %v352
  %v462 = vadd.f32 %v60, %v354
  %v463 = vadd.f32 %v61, %v425
  %v464 = vadd.f32 %v62, %v427
  %v465 = vadd.f32 %v63, %v356
  %v466 = vadd.f32 %v64, %v358
  %v467 = vadd.f32 %v65, %v429
  %v468 = vadd.f32 %v66, %v431
  %v469 = vadd.f32 %v67, %v362
  %v470 = vadd.f32 %v68, %v364
  %v471 = vadd.f32 %v69, %v435
  %v472 = vadd.f32 %v70, %v437
  %v473 = vadd.f32 %v71, %v366
  %v474 = vadd.f32 %v72, %v368
  %v475 = vadd.f32 %v73, %v439
  %v476 = vadd.f32 %v74, %v441
  %v477 = vadd.f32 %v75, %v372
  %v478 = vadd.f32 %v76, %v374
  %v479 = vadd.f32 %v77, %v445
  %v480 = vadd.f32 %v78, %v447
  %v481 = vadd.f32 %v79, %v376
  %v482 = vadd.f32 %v80, %v378
  %v483 = vadd.f32 %v81, %v449
  %v484 = vadd.f32 %v82, %v451
  %485 = vst [vmem:[#allocation2] sm:$0xff] %v453
  %486 = vst [vmem:[#allocation2 + $0x8] sm:$0xff] %v454
  %487 = vst [vmem:[#allocation2 + $0x10] sm:$0xff] %v455
  %488 = vst [vmem:[#allocation2 + $0x18] sm:$0xff] %v456
  %489 = vst [vmem:[#allocation2 + $0x20] sm:$0xff] %v457
  %490 = vst [vmem:[#allocation2 + $0x28] sm:$0xff] %v458
  %491 = vst [vmem:[#allocation2 + $0x30] sm:$0xff] %v459
  %492 = vst [vmem:[#allocation2 + $0x38] sm:$0xff] %v460
  %493 = vst [vmem:[#allocation2 + $0x40] sm:$0xff] %v461
  %494 = vst [vmem:[#allocation2 + $0x48] sm:$0xff] %v462
  %495 = vst [vmem:[#allocation2 + $0x50] sm:$0xff] %v463
  %496 = vst [vmem:[#allocation2 + $0x58] sm:$0xff] %v464
  %497 = vst [vmem:[#allocation2 + $0x60] sm:$0xff] %v465
  %498 = vst [vmem:[#allocation2 + $0x68] sm:$0xff] %v466
  %499 = vst [vmem:[#allocation2 + $0x70] sm:$0xff] %v467
  %500 = vst [vmem:[#allocation2 + $0x78] sm:$0xff] %v468
  %501 = vst [vmem:[#allocation2 + $0x80] sm:$0xff] %v469
  %502 = vst [vmem:[#allocation2 + $0x88] sm:$0xff] %v470
  %503 = vst [vmem:[#allocation2 + $0x90] sm:$0xff] %v471
  %504 = vst [vmem:[#allocation2 + $0x98] sm:$0xff] %v472
  %505 = vst [vmem:[#allocation2 + $0xa0] sm:$0xff] %v473
  %506 = vst [vmem:[#allocation2 + $0xa8] sm:$0xff] %v474
  %507 = vst [vmem:[#allocation2 + $0xb0] sm:$0xff] %v475
  %508 = vst [vmem:[#allocation2 + $0xb8] sm:$0xff] %v476
  %509 = vst [vmem:[#allocation2 + $0xc0] sm:$0xff] %v477
  %510 = vst [vmem:[#allocation2 + $0xc8] sm:$0xff] %v478
  %511 = vst [vmem:[#allocation2 + $0xd0] sm:$0xff] %v479
  %512 = vst [vmem:[#allocation2 + $0xd8] sm:$0xff] %v480
  %513 = vst [vmem:[#allocation2 + $0xe0] sm:$0xff] %v481
  %514 = vst [vmem:[#allocation2 + $0xe8] sm:$0xff] %v482
  %515 = vst [vmem:[#allocation2 + $0xf0] sm:$0xff] %v483
  %516 = vst [vmem:[#allocation2 + $0xf8] sm:$0xff] %v484
  // Predicated region
  $region18: #{decoder_rnn_forward.3} parent=0 // pred_check
    %p517 = pneg %p15
  $region19: #{decoder_rnn_forward.3} parent=0 // pred_check_branch
    %519 = sbr.rel (%p517) target = $region21
  $region20: #{decoder_rnn_forward.3} parent=0 // pred_region
    %v520 = vld [vmem:[#allocation2] sm:$0xff]
    %v521 = vld [vmem:[#allocation2 + $0x8] sm:$0xff]
    %v522 = vld [vmem:[#allocation2 + $0x10] sm:$0xff]
    %v523 = vld [vmem:[#allocation2 + $0x18] sm:$0xff]
    %v524 = vld [vmem:[#allocation2 + $0x20] sm:$0xff]
    %v525 = vld [vmem:[#allocation2 + $0x28] sm:$0xff]
    %v526 = vld [vmem:[#allocation2 + $0x30] sm:$0xff]
    %v527 = vld [vmem:[#allocation2 + $0x38] sm:$0xff]
    %v528 = vld [vmem:[#allocation2 + $0x40] sm:$0xff]
    %v529 = vld [vmem:[#allocation2 + $0x48] sm:$0xff]
    %v530 = vld [vmem:[#allocation2 + $0x50] sm:$0xff]
    %v531 = vld [vmem:[#allocation2 + $0x58] sm:$0xff]
    %v532 = vld [vmem:[#allocation2 + $0x60] sm:$0xff]
    %v533 = vld [vmem:[#allocation2 + $0x68] sm:$0xff]
    %v534 = vld [vmem:[#allocation2 + $0x70] sm:$0xff]
    %v535 = vld [vmem:[#allocation2 + $0x78] sm:$0xff]
    %v536 = vld [vmem:[#allocation2 + $0x80] sm:$0xff]
    %v537 = vld [vmem:[#allocation2 + $0x88] sm:$0xff]
    %v538 = vld [vmem:[#allocation2 + $0x90] sm:$0xff]
    %v539 = vld [vmem:[#allocation2 + $0x98] sm:$0xff]
    %v540 = vld [vmem:[#allocation2 + $0xa0] sm:$0xff]
    %v541 = vld [vmem:[#allocation2 + $0xa8] sm:$0xff]
    %v542 = vld [vmem:[#allocation2 + $0xb0] sm:$0xff]
    %v543 = vld [vmem:[#allocation2 + $0xb8] sm:$0xff]
    %v544 = vld [vmem:[#allocation2 + $0xc0] sm:$0xff]
    %v545 = vld [vmem:[#allocation2 + $0xc8] sm:$0xff]
    %v546 = vld [vmem:[#allocation2 + $0xd0] sm:$0xff]
    %v547 = vld [vmem:[#allocation2 + $0xd8] sm:$0xff]
    %v548 = vld [vmem:[#allocation2 + $0xe0] sm:$0xff]
    %v549 = vld [vmem:[#allocation2 + $0xe8] sm:$0xff]
    %v550 = vld [vmem:[#allocation2 + $0xf0] sm:$0xff]
    %v551 = vld [vmem:[#allocation2 + $0xf8] sm:$0xff]
    %v552 = vld [vmem:[%s2] sm:$0xf]
    %v554 = vlaneseq
    %v555 = vshrl.u32 %v554, 7
    %v556 = vsub.s32 0, %v555
    %v557 = vrot.slane %v552, %v556
    %v558 = vlaneseq
    %v559 = vshrl.u32 %v558, 7
    %v560 = vsub.s32 1, %v559
    %v561 = vrot.slane %v552, %v560
    %v562 = vlaneseq
    %v563 = vshrl.u32 %v562, 7
    %v564 = vsub.s32 2, %v563
    %v565 = vrot.slane %v552, %v564
    %v566 = vlaneseq
    %v567 = vshrl.u32 %v566, 7
    %v568 = vsub.s32 3, %v567
    %v569 = vrot.slane %v552, %v568
    %v574 = vadd.f32 %v520, %v557
    %v575 = vadd.f32 %v521, %v561
    %v576 = vadd.f32 %v522, %v565
    %v577 = vadd.f32 %v523, %v569
    %v578 = vadd.f32 %v524, %v557
    %v579 = vadd.f32 %v525, %v561
    %v580 = vadd.f32 %v526, %v565
    %v581 = vadd.f32 %v527, %v569
    %v582 = vadd.f32 %v528, %v557
    %v583 = vadd.f32 %v529, %v561
    %v584 = vadd.f32 %v530, %v565
    %v585 = vadd.f32 %v531, %v569
    %v586 = vadd.f32 %v532, %v557
    %v587 = vadd.f32 %v533, %v561
    %v588 = vadd.f32 %v534, %v565
    %v589 = vadd.f32 %v535, %v569
    %v590 = vadd.f32 %v536, %v557
    %v591 = vadd.f32 %v537, %v561
    %v592 = vadd.f32 %v538, %v565
    %v593 = vadd.f32 %v539, %v569
    %v594 = vadd.f32 %v540, %v557
    %v595 = vadd.f32 %v541, %v561
    %v596 = vadd.f32 %v542, %v565
    %v597 = vadd.f32 %v543, %v569
    %v598 = vadd.f32 %v544, %v557
    %v599 = vadd.f32 %v545, %v561
    %v600 = vadd.f32 %v546, %v565
    %v601 = vadd.f32 %v547, %v569
    %v602 = vadd.f32 %v548, %v557
    %v603 = vadd.f32 %v549, %v561
    %v604 = vadd.f32 %v550, %v565
    %v605 = vadd.f32 %v551, %v569
    %606 = vst [vmem:[%s3] sm:$0xff] %v574
    %607 = vst [vmem:[%s3 + $0x8] sm:$0xff] %v575
    %608 = vst [vmem:[%s3 + $0x10] sm:$0xff] %v576
    %609 = vst [vmem:[%s3 + $0x18] sm:$0xff] %v577
    %610 = vst [vmem:[%s3 + $0x20] sm:$0xff] %v578
    %611 = vst [vmem:[%s3 + $0x28] sm:$0xff] %v579
    %612 = vst [vmem:[%s3 + $0x30] sm:$0xff] %v580
    %613 = vst [vmem:[%s3 + $0x38] sm:$0xff] %v581
    %614 = vst [vmem:[%s3 + $0x40] sm:$0xff] %v582
    %615 = vst [vmem:[%s3 + $0x48] sm:$0xff] %v583
    %616 = vst [vmem:[%s3 + $0x50] sm:$0xff] %v584
    %617 = vst [vmem:[%s3 + $0x58] sm:$0xff] %v585
    %618 = vst [vmem:[%s3 + $0x60] sm:$0xff] %v586
    %619 = vst [vmem:[%s3 + $0x68] sm:$0xff] %v587
    %620 = vst [vmem:[%s3 + $0x70] sm:$0xff] %v588
    %621 = vst [vmem:[%s3 + $0x78] sm:$0xff] %v589
    %622 = vst [vmem:[%s3 + $0x80] sm:$0xff] %v590
    %623 = vst [vmem:[%s3 + $0x88] sm:$0xff] %v591
    %624 = vst [vmem:[%s3 + $0x90] sm:$0xff] %v592
    %625 = vst [vmem:[%s3 + $0x98] sm:$0xff] %v593
    %626 = vst [vmem:[%s3 + $0xa0] sm:$0xff] %v594
    %627 = vst [vmem:[%s3 + $0xa8] sm:$0xff] %v595
    %628 = vst [vmem:[%s3 + $0xb0] sm:$0xff] %v596
    %629 = vst [vmem:[%s3 + $0xb8] sm:$0xff] %v597
    %630 = vst [vmem:[%s3 + $0xc0] sm:$0xff] %v598
    %631 = vst [vmem:[%s3 + $0xc8] sm:$0xff] %v599
    %632 = vst [vmem:[%s3 + $0xd0] sm:$0xff] %v600
    %633 = vst [vmem:[%s3 + $0xd8] sm:$0xff] %v601
    %634 = vst [vmem:[%s3 + $0xe0] sm:$0xff] %v602
    %635 = vst [vmem:[%s3 + $0xe8] sm:$0xff] %v603
    %636 = vst [vmem:[%s3 + $0xf0] sm:$0xff] %v604
    %637 = vst [vmem:[%s3 + $0xf8] sm:$0xff] %v605
  $region21: #{decoder_rnn_forward.3} parent=0 // pred_fallthru
    _
  // Predicated region
  $region22: #{decoder_rnn_forward.3} parent=0 // pred_check
    _
  $region23: #{decoder_rnn_forward.3} parent=0 // pred_check_branch
    %639 = sbr.rel (0) target = $region25
  $region24: #{decoder_rnn_forward.3} parent=0 // pred_region
    _
  $region25: #{decoder_rnn_forward.3} parent=0 // pred_fallthru
    _
  // Predicated region
  $region26: #{decoder_rnn_forward.3} parent=0 // pred_check
    _
  $region27: #{decoder_rnn_forward.3} parent=0 // pred_check_branch
    %641 = sbr.rel (0) target = $region29
  $region28: #{decoder_rnn_forward.3} parent=0 // pred_region
    _
  $region29: #{decoder_rnn_forward.3} parent=0 // pred_fallthru
    _

// kernel: decoder_rnn_forward.4
$region0: #{decoder_rnn_forward.4}
  #allocation0 [shape = 'u32[]', space=smem, size = 0x4, offset = 0x4, fixed_abs, tag = 'smem constant byte address 0x4 - core index']
  #allocation1 [shape = 'u32[144,128]{1,0:T(1,128)}', space=vmem, size = 0x12000, scoped, tag = 'internal scratch']
  #allocation2 [shape = 'f32[8,128]{1,0:T(8,128)}', space=vmem, size = 0x1000, scoped, tag = 'scratch operand']
  #allocation3 [shape = 'f32[8,128]{1,0:T(8,128)}', space=vmem, size = 0x1000, scoped, tag = 'scratch operand']
  %s0 = inlined_call_operand.vmem [shape: f32[8,8,512], index: 0, kind: input, shape index: {}]
  %s1 = inlined_call_operand.vmem [shape: bf16[128,512], index: 1, kind: input, shape index: {}]
  %s2 = inlined_call_operand.vmem [shape: bf16[8,8,128], index: 2, kind: output, shape index: {}]
  %s3 = sld [smem:[#allocation0]]
  $region22: #{decoder_rnn_forward.4} parent=0
    _
  %s5 = ssub.s32 1, %s3
  %s6 = scalar_select 0, %s5, %s3
  // Predicated region
  $region2: #{decoder_rnn_forward.4} parent=0 // pred_check
    _
  $region3: #{decoder_rnn_forward.4} parent=0 // pred_check_branch
    %8 = sbr.rel (0) target = $region5
  $region4: #{decoder_rnn_forward.4} parent=0 // pred_region
    _
  $region5: #{decoder_rnn_forward.4} parent=0 // pred_fallthru
    _
  // Predicated region
  $region6: #{decoder_rnn_forward.4} parent=0 // pred_check
    _
  $region7: #{decoder_rnn_forward.4} parent=0 // pred_check_branch
    %10 = sbr.rel (0) target = $region9
  $region8: #{decoder_rnn_forward.4} parent=0 // pred_region
    _
  $region9: #{decoder_rnn_forward.4} parent=0 // pred_fallthru
    _
  %p12 = scmp.eq.s32.totalorder 0, 0
  // Predicated region
  $region10: #{decoder_rnn_forward.4} parent=0 // pred_check
    %p13 = pneg %p12
  $region11: #{decoder_rnn_forward.4} parent=0 // pred_check_branch
    %15 = sbr.rel (%p13) target = $region13
  $region12: #{decoder_rnn_forward.4} parent=0 // pred_region
    %16 = vst [vmem:[#allocation2] sm:$0xff] 0.0
    %17 = vst [vmem:[#allocation3] sm:$0xff] 0.0
  $region13: #{decoder_rnn_forward.4} parent=0 // pred_fallthru
    _
  %v18 = vld [vmem:[%s1] sm:$0xff]
  %v19 = vld [vmem:[%s1 + $0x8] sm:$0xff]
  %v20 = vld [vmem:[%s1 + $0x10] sm:$0xff]
  %v21 = vld [vmem:[%s1 + $0x18] sm:$0xff]
  %v22 = vld [vmem:[%s1 + $0x20] sm:$0xff]
  %v23 = vld [vmem:[%s1 + $0x28] sm:$0xff]
  %v24 = vld [vmem:[%s1 + $0x30] sm:$0xff]
  %v25 = vld [vmem:[%s1 + $0x38] sm:$0xff]
  %v26 = vld [vmem:[%s1 + $0x40] sm:$0xff]
  %v27 = vld [vmem:[%s1 + $0x48] sm:$0xff]
  %v28 = vld [vmem:[%s1 + $0x50] sm:$0xff]
  %v29 = vld [vmem:[%s1 + $0x58] sm:$0xff]
  %v30 = vld [vmem:[%s1 + $0x60] sm:$0xff]
  %v31 = vld [vmem:[%s1 + $0x68] sm:$0xff]
  %v32 = vld [vmem:[%s1 + $0x70] sm:$0xff]
  %v33 = vld [vmem:[%s1 + $0x78] sm:$0xff]
  %v34 = vld [vmem:[%s1 + $0x80] sm:$0xff]
  %v35 = vld [vmem:[%s1 + $0x88] sm:$0xff]
  %v36 = vld [vmem:[%s1 + $0x90] sm:$0xff]
  %v37 = vld [vmem:[%s1 + $0x98] sm:$0xff]
  %v38 = vld [vmem:[%s1 + $0xa0] sm:$0xff]
  %v39 = vld [vmem:[%s1 + $0xa8] sm:$0xff]
  %v40 = vld [vmem:[%s1 + $0xb0] sm:$0xff]
  %v41 = vld [vmem:[%s1 + $0xb8] sm:$0xff]
  %v42 = vld [vmem:[%s1 + $0xc0] sm:$0xff]
  %v43 = vld [vmem:[%s1 + $0xc8] sm:$0xff]
  %v44 = vld [vmem:[%s1 + $0xd0] sm:$0xff]
  %v45 = vld [vmem:[%s1 + $0xd8] sm:$0xff]
  %v46 = vld [vmem:[%s1 + $0xe0] sm:$0xff]
  %v47 = vld [vmem:[%s1 + $0xe8] sm:$0xff]
  %v48 = vld [vmem:[%s1 + $0xf0] sm:$0xff]
  %v49 = vld [vmem:[%s1 + $0xf8] sm:$0xff]
  %v50 = vld [vmem:[#allocation2] sm:$0xff]
  %v51 = vld [vmem:[#allocation3] sm:$0xff]
  %v52 = vld [vmem:[%s0] sm:$0xff]
  %v53 = vld [vmem:[%s0 + $0x8] sm:$0xff]
  %v54 = vld [vmem:[%s0 + $0x10] sm:$0xff]
  %v55 = vld [vmem:[%s0 + $0x18] sm:$0xff]
  %v56 = vpack.c.bf16 %v50, %v50
  %v89 = vunpack.c.l.b16 %v18
  %v90 = vunpack.c.h.b16 %v18
  %v91 = vunpack.c.l.b16 %v19
  %v92 = vunpack.c.h.b16 %v19
  %v93 = vunpack.c.l.b16 %v20
  %v94 = vunpack.c.h.b16 %v20
  %v95 = vunpack.c.l.b16 %v21
  %v96 = vunpack.c.h.b16 %v21
  %v97 = vunpack.c.l.b16 %v22
  %v98 = vunpack.c.h.b16 %v22
  %v99 = vunpack.c.l.b16 %v23
  %v100 = vunpack.c.h.b16 %v23
  %v101 = vunpack.c.l.b16 %v24
  %v102 = vunpack.c.h.b16 %v24
  %v103 = vunpack.c.l.b16 %v25
  %v104 = vunpack.c.h.b16 %v25
  %v105 = vunpack.c.l.b16 %v26
  %v106 = vunpack.c.h.b16 %v26
  %v107 = vunpack.c.l.b16 %v27
  %v108 = vunpack.c.h.b16 %v27
  %v109 = vunpack.c.l.b16 %v28
  %v110 = vunpack.c.h.b16 %v28
  %v111 = vunpack.c.l.b16 %v29
  %v112 = vunpack.c.h.b16 %v29
  %v113 = vunpack.c.l.b16 %v30
  %v114 = vunpack.c.h.b16 %v30
  %v115 = vunpack.c.l.b16 %v31
  %v116 = vunpack.c.h.b16 %v31
  %v117 = vunpack.c.l.b16 %v32
  %v118 = vunpack.c.h.b16 %v32
  %v119 = vunpack.c.l.b16 %v33
  %v120 = vunpack.c.h.b16 %v33
  %v121 = vunpack.c.l.b16 %v34
  %v122 = vunpack.c.h.b16 %v34
  %v123 = vunpack.c.l.b16 %v35
  %v124 = vunpack.c.h.b16 %v35
  %v125 = vunpack.c.l.b16 %v36
  %v126 = vunpack.c.h.b16 %v36
  %v127 = vunpack.c.l.b16 %v37
  %v128 = vunpack.c.h.b16 %v37
  %v129 = vunpack.c.l.b16 %v38
  %v130 = vunpack.c.h.b16 %v38
  %v131 = vunpack.c.l.b16 %v39
  %v132 = vunpack.c.h.b16 %v39
  %v133 = vunpack.c.l.b16 %v40
  %v134 = vunpack.c.h.b16 %v40
  %v135 = vunpack.c.l.b16 %v41
  %v136 = vunpack.c.h.b16 %v41
  %v137 = vunpack.c.l.b16 %v42
  %v138 = vunpack.c.h.b16 %v42
  %v139 = vunpack.c.l.b16 %v43
  %v140 = vunpack.c.h.b16 %v43
  %v141 = vunpack.c.l.b16 %v44
  %v142 = vunpack.c.h.b16 %v44
  %v143 = vunpack.c.l.b16 %v45
  %v144 = vunpack.c.h.b16 %v45
  %v145 = vunpack.c.l.b16 %v46
  %v146 = vunpack.c.h.b16 %v46
  %v147 = vunpack.c.l.b16 %v47
  %v148 = vunpack.c.h.b16 %v47
  %v149 = vunpack.c.l.b16 %v48
  %v150 = vunpack.c.h.b16 %v48
  %v151 = vunpack.c.l.b16 %v49
  %v152 = vunpack.c.h.b16 %v49
  %v153 = vpack.c.b16 %v93, %v89
  %v154 = vpack.c.b16 %v94, %v90
  %v155 = vpack.c.b16 %v95, %v91
  %v156 = vpack.c.b16 %v96, %v92
  %v157 = vpack.c.b16 %v101, %v97
  %v158 = vpack.c.b16 %v102, %v98
  %v159 = vpack.c.b16 %v103, %v99
  %v160 = vpack.c.b16 %v104, %v100
  %v161 = vpack.c.b16 %v109, %v105
  %v162 = vpack.c.b16 %v110, %v106
  %v163 = vpack.c.b16 %v111, %v107
  %v164 = vpack.c.b16 %v112, %v108
  %v165 = vpack.c.b16 %v117, %v113
  %v166 = vpack.c.b16 %v118, %v114
  %v167 = vpack.c.b16 %v119, %v115
  %v168 = vpack.c.b16 %v120, %v116
  %v169 = vpack.c.b16 %v125, %v121
  %v170 = vpack.c.b16 %v126, %v122
  %v171 = vpack.c.b16 %v127, %v123
  %v172 = vpack.c.b16 %v128, %v124
  %v173 = vpack.c.b16 %v133, %v129
  %v174 = vpack.c.b16 %v134, %v130
  %v175 = vpack.c.b16 %v135, %v131
  %v176 = vpack.c.b16 %v136, %v132
  %v177 = vpack.c.b16 %v141, %v137
  %v178 = vpack.c.b16 %v142, %v138
  %v179 = vpack.c.b16 %v143, %v139
  %v180 = vpack.c.b16 %v144, %v140
  %v181 = vpack.c.b16 %v149, %v145
  %v182 = vpack.c.b16 %v150, %v146
  %v183 = vpack.c.b16 %v151, %v147
  %v184 = vpack.c.b16 %v152, %v148
  %217 = vmatprep.subr.bf16.mxu0 %v154
  %218 = vmatpush1.bf16.msra.mxu0 %v153
  %219 = vmatprep.subr.bf16.mxu0 %v158
  %220 = vmatpush1.bf16.msra.mxu0 %v157
  %221 = vmatprep.subr.bf16.mxu0 %v162
  %222 = vmatpush1.bf16.msra.mxu0 %v161
  %223 = vmatprep.subr.bf16.mxu0 %v166
  %224 = vmatpush1.bf16.msra.mxu0 %v165
  %225 = vmatprep.subr.bf16.mxu0 %v170
  %226 = vmatpush1.bf16.msra.mxu0 %v169
  %227 = vmatprep.subr.bf16.mxu0 %v174
  %228 = vmatpush1.bf16.msra.mxu0 %v173
  %229 = vmatprep.subr.bf16.mxu0 %v178
  %230 = vmatpush1.bf16.msra.mxu0 %v177
  %231 = vmatprep.subr.bf16.mxu0 %v182
  %232 = vmatpush1.bf16.msra.mxu0 %v181
  %233 = vmatprep.subr.bf16.mxu0 0
  %234 = vmatpush1.bf16.msra.mxu0 0
  %235 = vmatprep.subr.bf16.mxu0 0
  %236 = vmatpush1.bf16.msra.mxu0 0
  %237 = vmatprep.subr.bf16.mxu0 0
  %238 = vmatpush1.bf16.msra.mxu0 0
  %239 = vmatprep.subr.bf16.mxu0 0
  %240 = vmatpush1.bf16.msra.mxu0 0
  %241 = vmatprep.subr.bf16.mxu0 0
  %242 = vmatpush1.bf16.msra.mxu0 0
  %243 = vmatprep.subr.bf16.mxu0 0
  %244 = vmatpush1.bf16.msra.mxu0 0
  %245 = vmatprep.subr.bf16.mxu0 0
  %246 = vmatpush1.bf16.msra.mxu0 0
  %247 = vmatprep.subr.bf16.mxu0 0
  %248 = vmatpush1.bf16.msra.mxu0 0
  %249 = vmatprep.mubr.bf16.mxu0 0
  %250 = vmatmul.mubr.bf16.gmra.mrb[0].mxu0 %v56
  %v251 = vpop.f32.mrb[0].mxu0
  %v252 = vadd.f32 0.0, %v251
  %v253 = vpop.f32.mrb[0].mxu0
  %v254 = vadd.f32 0.0, %v253
  %v255 = vpop.f32.mrb[0].mxu0
  %v256 = vpop.f32.mrb[0].mxu0
  %257 = vdwg.mxu0
  %258 = vmatprep.subr.bf16.mxu0 %v156
  %259 = vmatpush1.bf16.msra.mxu0 %v155
  %260 = vmatprep.subr.bf16.mxu0 %v160
  %261 = vmatpush1.bf16.msra.mxu0 %v159
  %262 = vmatprep.subr.bf16.mxu0 %v164
  %263 = vmatpush1.bf16.msra.mxu0 %v163
  %264 = vmatprep.subr.bf16.mxu0 %v168
  %265 = vmatpush1.bf16.msra.mxu0 %v167
  %266 = vmatprep.subr.bf16.mxu0 %v172
  %267 = vmatpush1.bf16.msra.mxu0 %v171
  %268 = vmatprep.subr.bf16.mxu0 %v176
  %269 = vmatpush1.bf16.msra.mxu0 %v175
  %270 = vmatprep.subr.bf16.mxu0 %v180
  %271 = vmatpush1.bf16.msra.mxu0 %v179
  %272 = vmatprep.subr.bf16.mxu0 %v184
  %273 = vmatpush1.bf16.msra.mxu0 %v183
  %274 = vmatprep.subr.bf16.mxu0 0
  %275 = vmatpush1.bf16.msra.mxu0 0
  %276 = vmatprep.subr.bf16.mxu0 0
  %277 = vmatpush1.bf16.msra.mxu0 0
  %278 = vmatprep.subr.bf16.mxu0 0
  %279 = vmatpush1.bf16.msra.mxu0 0
  %280 = vmatprep.subr.bf16.mxu0 0
  %281 = vmatpush1.bf16.msra.mxu0 0
  %282 = vmatprep.subr.bf16.mxu0 0
  %283 = vmatpush1.bf16.msra.mxu0 0
  %284 = vmatprep.subr.bf16.mxu0 0
  %285 = vmatpush1.bf16.msra.mxu0 0
  %286 = vmatprep.subr.bf16.mxu0 0
  %287 = vmatpush1.bf16.msra.mxu0 0
  %288 = vmatprep.subr.bf16.mxu0 0
  %289 = vmatpush1.bf16.msra.mxu0 0
  %290 = vmatprep.mubr.bf16.mxu0 0
  %291 = vmatmul.mubr.bf16.gmra.mrb[0].mxu0 %v56
  %v292 = vpop.f32.mrb[0].mxu0
  %v293 = vadd.f32 0.0, %v292
  %v294 = vpop.f32.mrb[0].mxu0
  %v295 = vadd.f32 0.0, %v294
  %v296 = vpop.f32.mrb[0].mxu0
  %v297 = vpop.f32.mrb[0].mxu0
  %298 = vdwg.mxu0
  %v299 = vadd.f32 %v52, %v252
  %v300 = vadd.f32 %v53, %v254
  %v301 = vadd.f32 %v54, %v293
  %v302 = vadd.f32 %v55, %v295
  %v303 = vxor.u32 %v299, 2147483648
  %v304 = vmul.f32 %v303, 1.442695
  %v305 = vpow.pop %v304
  %v306 = vadd.f32 %v305, 1.0
  %v307 = vrcp.pop %v306
  %v308 = vmul.f32 1.0, %v307
  %v309 = vxor.u32 %v300, 2147483648
  %v310 = vmul.f32 %v309, 1.442695
  %v311 = vpow.pop %v310
  %v312 = vadd.f32 %v311, 1.0
  %v313 = vrcp.pop %v312
  %v314 = vmul.f32 1.0, %v313
  %v315 = vtanh.pop %v301
  %v316 = vxor.u32 %v302, 2147483648
  %v317 = vmul.f32 %v316, 1.442695
  %v318 = vpow.pop %v317
  %v319 = vadd.f32 %v318, 1.0
  %v320 = vrcp.pop %v319
  %v321 = vmul.f32 1.0, %v320
  %v322 = vmul.f32 %v314, %v51
  %v323 = vmul.f32 %v308, %v315
  %v324 = vadd.f32 %v322, %v323
  %v325 = vtanh.pop %v324
  %v326 = vmul.f32 %v321, %v325
  %327 = vst [vmem:[#allocation2] sm:$0xff] %v326
  %328 = vst [vmem:[#allocation3] sm:$0xff] %v324
  %v329 = vpack.c.bf16 %v326, %v326
  %330 = vst [vmem:[%s2] sm:$0xf] %v329
  %v331 = vld [vmem:[#allocation2] sm:$0xff]
  %v332 = vld [vmem:[#allocation3] sm:$0xff]
  %s333 = scalar_lea.vmem %s0, 32
  %v334 = vld [vmem:[%s333] sm:$0xff]
  %v335 = vld [vmem:[%s333 + $0x8] sm:$0xff]
  %v336 = vld [vmem:[%s333 + $0x10] sm:$0xff]
  %v337 = vld [vmem:[%s333 + $0x18] sm:$0xff]
  %v338 = vpack.c.bf16 %v331, %v331
  %339 = vmatprep.subr.bf16.mxu0 %v154
  %340 = vmatpush1.bf16.msra.mxu0 %v153
  %341 = vmatprep.subr.bf16.mxu0 %v158
  %342 = vmatpush1.bf16.msra.mxu0 %v157
  %343 = vmatprep.subr.bf16.mxu0 %v162
  %344 = vmatpush1.bf16.msra.mxu0 %v161
  %345 = vmatprep.subr.bf16.mxu0 %v166
  %346 = vmatpush1.bf16.msra.mxu0 %v165
  %347 = vmatprep.subr.bf16.mxu0 %v170
  %348 = vmatpush1.bf16.msra.mxu0 %v169
  %349 = vmatprep.subr.bf16.mxu0 %v174
  %350 = vmatpush1.bf16.msra.mxu0 %v173
  %351 = vmatprep.subr.bf16.mxu0 %v178
  %352 = vmatpush1.bf16.msra.mxu0 %v177
  %353 = vmatprep.subr.bf16.mxu0 %v182
  %354 = vmatpush1.bf16.msra.mxu0 %v181
  %355 = vmatprep.subr.bf16.mxu0 0
  %356 = vmatpush1.bf16.msra.mxu0 0
  %357 = vmatprep.subr.bf16.mxu0 0
  %358 = vmatpush1.bf16.msra.mxu0 0
  %359 = vmatprep.subr.bf16.mxu0 0
  %360 = vmatpush1.bf16.msra.mxu0 0
  %361 = vmatprep.subr.bf16.mxu0 0
  %362 = vmatpush1.bf16.msra.mxu0 0
  %363 = vmatprep.subr.bf16.mxu0 0
  %364 = vmatpush1.bf16.msra.mxu0 0
  %365 = vmatprep.subr.bf16.mxu0 0
  %366 = vmatpush1.bf16.msra.mxu0 0
  %367 = vmatprep.subr.bf16.mxu0 0
  %368 = vmatpush1.bf16.msra.mxu0 0
  %369 = vmatprep.subr.bf16.mxu0 0
  %370 = vmatpush1.bf16.msra.mxu0 0
  %371 = vmatprep.mubr.bf16.mxu0 0
  %372 = vmatmul.mubr.bf16.gmra.mrb[0].mxu0 %v338
  %v373 = vpop.f32.mrb[0].mxu0
  %v374 = vadd.f32 0.0, %v373
  %v375 = vpop.f32.mrb[0].mxu0
  %v376 = vadd.f32 0.0, %v375
  %v377 = vpop.f32.mrb[0].mxu0
  %v378 = vpop.f32.mrb[0].mxu0
  %379 = vdwg.mxu0
  %380 = vmatprep.subr.bf16.mxu0 %v156
  %381 = vmatpush1.bf16.msra.mxu0 %v155
  %382 = vmatprep.subr.bf16.mxu0 %v160
  %383 = vmatpush1.bf16.msra.mxu0 %v159
  %384 = vmatprep.subr.bf16.mxu0 %v164
  %385 = vmatpush1.bf16.msra.mxu0 %v163
  %386 = vmatprep.subr.bf16.mxu0 %v168
  %387 = vmatpush1.bf16.msra.mxu0 %v167
  %388 = vmatprep.subr.bf16.mxu0 %v172
  %389 = vmatpush1.bf16.msra.mxu0 %v171
  %390 = vmatprep.subr.bf16.mxu0 %v176
  %391 = vmatpush1.bf16.msra.mxu0 %v175
  %392 = vmatprep.subr.bf16.mxu0 %v180
  %393 = vmatpush1.bf16.msra.mxu0 %v179
  %394 = vmatprep.subr.bf16.mxu0 %v184
  %395 = vmatpush1.bf16.msra.mxu0 %v183
  %396 = vmatprep.subr.bf16.mxu0 0
  %397 = vmatpush1.bf16.msra.mxu0 0
  %398 = vmatprep.subr.bf16.mxu0 0
  %399 = vmatpush1.bf16.msra.mxu0 0
  %400 = vmatprep.subr.bf16.mxu0 0
  %401 = vmatpush1.bf16.msra.mxu0 0
  %402 = vmatprep.subr.bf16.mxu0 0
  %403 = vmatpush1.bf16.msra.mxu0 0
  %404 = vmatprep.subr.bf16.mxu0 0
  %405 = vmatpush1.bf16.msra.mxu0 0
  %406 = vmatprep.subr.bf16.mxu0 0
  %407 = vmatpush1.bf16.msra.mxu0 0
  %408 = vmatprep.subr.bf16.mxu0 0
  %409 = vmatpush1.bf16.msra.mxu0 0
  %410 = vmatprep.subr.bf16.mxu0 0
  %411 = vmatpush1.bf16.msra.mxu0 0
  %412 = vmatprep.mubr.bf16.mxu0 0
  %413 = vmatmul.mubr.bf16.gmra.mrb[0].mxu0 %v338
  %v414 = vpop.f32.mrb[0].mxu0
  %v415 = vadd.f32 0.0, %v414
  %v416 = vpop.f32.mrb[0].mxu0
  %v417 = vadd.f32 0.0, %v416
  %v418 = vpop.f32.mrb[0].mxu0
  %v419 = vpop.f32.mrb[0].mxu0
  %420 = vdwg.mxu0
  %v421 = vadd.f32 %v334, %v374
  %v422 = vadd.f32 %v335, %v376
  %v423 = vadd.f32 %v336, %v415
  %v424 = vadd.f32 %v337, %v417
  %v425 = vxor.u32 %v421, 2147483648
  %v426 = vmul.f32 %v425, 1.442695
  %v427 = vpow.pop %v426
  %v428 = vadd.f32 %v427, 1.0
  %v429 = vrcp.pop %v428
  %v430 = vmul.f32 1.0, %v429
  %v431 = vxor.u32 %v422, 2147483648
  %v432 = vmul.f32 %v431, 1.442695
  %v433 = vpow.pop %v432
  %v434 = vadd.f32 %v433, 1.0
  %v435 = vrcp.pop %v434
  %v436 = vmul.f32 1.0, %v435
  %v437 = vtanh.pop %v423
  %v438 = vxor.u32 %v424, 2147483648
  %v439 = vmul.f32 %v438, 1.442695
  %v440 = vpow.pop %v439
  %v441 = vadd.f32 %v440, 1.0
  %v442 = vrcp.pop %v441
  %v443 = vmul.f32 1.0, %v442
  %v444 = vmul.f32 %v436, %v332
  %v445 = vmul.f32 %v430, %v437
  %v446 = vadd.f32 %v444, %v445
  %v447 = vtanh.pop %v446
  %v448 = vmul.f32 %v443, %v447
  %449 = vst [vmem:[#allocation2] sm:$0xff] %v448
  %450 = vst [vmem:[#allocation3] sm:$0xff] %v446
  %v451 = vpack.c.bf16 %v448, %v448
  %s452 = scalar_lea.vmem %s2, 4
  %453 = vst [vmem:[%s452] sm:$0xf] %v451
  %v454 = vld [vmem:[#allocation2] sm:$0xff]
  %v455 = vld [vmem:[#allocation3] sm:$0xff]
  %s456 = scalar_lea.vmem %s0, 64
  %v457 = vld [vmem:[%s456] sm:$0xff]
  %v458 = vld [vmem:[%s456 + $0x8] sm:$0xff]
  %v459 = vld [vmem:[%s456 + $0x10] sm:$0xff]
  %v460 = vld [vmem:[%s456 + $0x18] sm:$0xff]
  %v461 = vpack.c.bf16 %v454, %v454
  %462 = vmatprep.subr.bf16.mxu0 %v154
  %463 = vmatpush1.bf16.msra.mxu0 %v153
  %464 = vmatprep.subr.bf16.mxu0 %v158
  %465 = vmatpush1.bf16.msra.mxu0 %v157
  %466 = vmatprep.subr.bf16.mxu0 %v162
  %467 = vmatpush1.bf16.msra.mxu0 %v161
  %468 = vmatprep.subr.bf16.mxu0 %v166
  %469 = vmatpush1.bf16.msra.mxu0 %v165
  %470 = vmatprep.subr.bf16.mxu0 %v170
  %471 = vmatpush1.bf16.msra.mxu0 %v169
  %472 = vmatprep.subr.bf16.mxu0 %v174
  %473 = vmatpush1.bf16.msra.mxu0 %v173
  %474 = vmatprep.subr.bf16.mxu0 %v178
  %475 = vmatpush1.bf16.msra.mxu0 %v177
  %476 = vmatprep.subr.bf16.mxu0 %v182
  %477 = vmatpush1.bf16.msra.mxu0 %v181
  %478 = vmatprep.subr.bf16.mxu0 0
  %479 = vmatpush1.bf16.msra.mxu0 0
  %480 = vmatprep.subr.bf16.mxu0 0
  %481 = vmatpush1.bf16.msra.mxu0 0
  %482 = vmatprep.subr.bf16.mxu0 0
  %483 = vmatpush1.bf16.msra.mxu0 0
  %484 = vmatprep.subr.bf16.mxu0 0
  %485 = vmatpush1.bf16.msra.mxu0 0
  %486 = vmatprep.subr.bf16.mxu0 0
  %487 = vmatpush1.bf16.msra.mxu0 0
  %488 = vmatprep.subr.bf16.mxu0 0
  %489 = vmatpush1.bf16.msra.mxu0 0
  %490 = vmatprep.subr.bf16.mxu0 0
  %491 = vmatpush1.bf16.msra.mxu0 0
  %492 = vmatprep.subr.bf16.mxu0 0
  %493 = vmatpush1.bf16.msra.mxu0 0
  %494 = vmatprep.mubr.bf16.mxu0 0
  %495 = vmatmul.mubr.bf16.gmra.mrb[0].mxu0 %v461
  %v496 = vpop.f32.mrb[0].mxu0
  %v497 = vadd.f32 0.0, %v496
  %v498 = vpop.f32.mrb[0].mxu0
  %v499 = vadd.f32 0.0, %v498
  %v500 = vpop.f32.mrb[0].mxu0
  %v501 = vpop.f32.mrb[0].mxu0
  %502 = vdwg.mxu0
  %503 = vmatprep.subr.bf16.mxu0 %v156
  %504 = vmatpush1.bf16.msra.mxu0 %v155
  %505 = vmatprep.subr.bf16.mxu0 %v160
  %506 = vmatpush1.bf16.msra.mxu0 %v159
  %507 = vmatprep.subr.bf16.mxu0 %v164
  %508 = vmatpush1.bf16.msra.mxu0 %v163
  %509 = vmatprep.subr.bf16.mxu0 %v168
  %510 = vmatpush1.bf16.msra.mxu0 %v167
  %511 = vmatprep.subr.bf16.mxu0 %v172
  %512 = vmatpush1.bf16.msra.mxu0 %v171
  %513 = vmatprep.subr.bf16.mxu0 %v176
  %514 = vmatpush1.bf16.msra.mxu0 %v175
  %515 = vmatprep.subr.bf16.mxu0 %v180
  %516 = vmatpush1.bf16.msra.mxu0 %v179
  %517 = vmatprep.subr.bf16.mxu0 %v184
  %518 = vmatpush1.bf16.msra.mxu0 %v183
  %519 = vmatprep.subr.bf16.mxu0 0
  %520 = vmatpush1.bf16.msra.mxu0 0
  %521 = vmatprep.subr.bf16.mxu0 0
  %522 = vmatpush1.bf16.msra.mxu0 0
  %523 = vmatprep.subr.bf16.mxu0 0
  %524 = vmatpush1.bf16.msra.mxu0 0
  %525 = vmatprep.subr.bf16.mxu0 0
  %526 = vmatpush1.bf16.msra.mxu0 0
  %527 = vmatprep.subr.bf16.mxu0 0
  %528 = vmatpush1.bf16.msra.mxu0 0
  %529 = vmatprep.subr.bf16.mxu0 0
  %530 = vmatpush1.bf16.msra.mxu0 0
  %531 = vmatprep.subr.bf16.mxu0 0
  %532 = vmatpush1.bf16.msra.mxu0 0
  %533 = vmatprep.subr.bf16.mxu0 0
  %534 = vmatpush1.bf16.msra.mxu0 0
  %535 = vmatprep.mubr.bf16.mxu0 0
  %536 = vmatmul.mubr.bf16.gmra.mrb[0].mxu0 %v461
  %v537 = vpop.f32.mrb[0].mxu0
  %v538 = vadd.f32 0.0, %v537
  %v539 = vpop.f32.mrb[0].mxu0
  %v540 = vadd.f32 0.0, %v539
  %v541 = vpop.f32.mrb[0].mxu0
  %v542 = vpop.f32.mrb[0].mxu0
  %543 = vdwg.mxu0
  %v544 = vadd.f32 %v457, %v497
  %v545 = vadd.f32 %v458, %v499
  %v546 = vadd.f32 %v459, %v538
  %v547 = vadd.f32 %v460, %v540
  %v548 = vxor.u32 %v544, 2147483648
  %v549 = vmul.f32 %v548, 1.442695
  %v550 = vpow.pop %v549
  %v551 = vadd.f32 %v550, 1.0
  %v552 = vrcp.pop %v551
  %v553 = vmul.f32 1.0, %v552
  %v554 = vxor.u32 %v545, 2147483648
  %v555 = vmul.f32 %v554, 1.442695
  %v556 = vpow.pop %v555
  %v557 = vadd.f32 %v556, 1.0
  %v558 = vrcp.pop %v557
  %v559 = vmul.f32 1.0, %v558
  %v560 = vtanh.pop %v546
  %v561 = vxor.u32 %v547, 2147483648
  %v562 = vmul.f32 %v561, 1.442695
  %v563 = vpow.pop %v562
  %v564 = vadd.f32 %v563, 1.0
  %v565 = vrcp.pop %v564
  %v566 = vmul.f32 1.0, %v565
  %v567 = vmul.f32 %v559, %v455
  %v568 = vmul.f32 %v553, %v560
  %v569 = vadd.f32 %v567, %v568
  %v570 = vtanh.pop %v569
  %v571 = vmul.f32 %v566, %v570
  %572 = vst [vmem:[#allocation2] sm:$0xff] %v571
  %573 = vst [vmem:[#allocation3] sm:$0xff] %v569
  %v574 = vpack.c.bf16 %v571, %v571
  %s575 = scalar_lea.vmem %s2, 8
  %576 = vst [vmem:[%s575] sm:$0xf] %v574
  %v577 = vld [vmem:[#allocation2] sm:$0xff]
  %v578 = vld [vmem:[#allocation3] sm:$0xff]
  %s579 = scalar_lea.vmem %s0, 96
  %v580 = vld [vmem:[%s579] sm:$0xff]
  %v581 = vld [vmem:[%s579 + $0x8] sm:$0xff]
  %v582 = vld [vmem:[%s579 + $0x10] sm:$0xff]
  %v583 = vld [vmem:[%s579 + $0x18] sm:$0xff]
  %v584 = vpack.c.bf16 %v577, %v577
  %585 = vmatprep.subr.bf16.mxu0 %v154
  %586 = vmatpush1.bf16.msra.mxu0 %v153
  %587 = vmatprep.subr.bf16.mxu0 %v158
  %588 = vmatpush1.bf16.msra.mxu0 %v157
  %589 = vmatprep.subr.bf16.mxu0 %v162
  %590 = vmatpush1.bf16.msra.mxu0 %v161
  %591 = vmatprep.subr.bf16.mxu0 %v166
  %592 = vmatpush1.bf16.msra.mxu0 %v165
  %593 = vmatprep.subr.bf16.mxu0 %v170
  %594 = vmatpush1.bf16.msra.mxu0 %v169
  %595 = vmatprep.subr.bf16.mxu0 %v174
  %596 = vmatpush1.bf16.msra.mxu0 %v173
  %597 = vmatprep.subr.bf16.mxu0 %v178
  %598 = vmatpush1.bf16.msra.mxu0 %v177
  %599 = vmatprep.subr.bf16.mxu0 %v182
  %600 = vmatpush1.bf16.msra.mxu0 %v181
  %601 = vmatprep.subr.bf16.mxu0 0
  %602 = vmatpush1.bf16.msra.mxu0 0
  %603 = vmatprep.subr.bf16.mxu0 0
  %604 = vmatpush1.bf16.msra.mxu0 0
  %605 = vmatprep.subr.bf16.mxu0 0
  %606 = vmatpush1.bf16.msra.mxu0 0
  %607 = vmatprep.subr.bf16.mxu0 0
  %608 = vmatpush1.bf16.msra.mxu0 0
  %609 = vmatprep.subr.bf16.mxu0 0
  %610 = vmatpush1.bf16.msra.mxu0 0
  %611 = vmatprep.subr.bf16.mxu0 0
  %612 = vmatpush1.bf16.msra.mxu0 0
  %613 = vmatprep.subr.bf16.mxu0 0
  %614 = vmatpush1.bf16.msra.mxu0 0
  %615 = vmatprep.subr.bf16.mxu0 0
  %616 = vmatpush1.bf16.msra.mxu0 0
  %617 = vmatprep.mubr.bf16.mxu0 0
  %618 = vmatmul.mubr.bf16.gmra.mrb[0].mxu0 %v584
  %v619 = vpop.f32.mrb[0].mxu0
  %v620 = vadd.f32 0.0, %v619
  %v621 = vpop.f32.mrb[0].mxu0
  %v622 = vadd.f32 0.0, %v621
  %v623 = vpop.f32.mrb[0].mxu0
  %v624 = vpop.f32.mrb[0].mxu0
  %625 = vdwg.mxu0
  %626 = vmatprep.subr.bf16.mxu0 %v156
  %627 = vmatpush1.bf16.msra.mxu0 %v155
  %628 = vmatprep.subr.bf16.mxu0 %v160
  %629 = vmatpush1.bf16.msra.mxu0 %v159
  %630 = vmatprep.subr.bf16.mxu0 %v164
  %631 = vmatpush1.bf16.msra.mxu0 %v163
  %632 = vmatprep.subr.bf16.mxu0 %v168
  %633 = vmatpush1.bf16.msra.mxu0 %v167
  %634 = vmatprep.subr.bf16.mxu0 %v172
  %635 = vmatpush1.bf16.msra.mxu0 %v171
  %636 = vmatprep.subr.bf16.mxu0 %v176
  %637 = vmatpush1.bf16.msra.mxu0 %v175
  %638 = vmatprep.subr.bf16.mxu0 %v180
  %639 = vmatpush1.bf16.msra.mxu0 %v179
  %640 = vmatprep.subr.bf16.mxu0 %v184
  %641 = vmatpush1.bf16.msra.mxu0 %v183
  %642 = vmatprep.subr.bf16.mxu0 0
  %643 = vmatpush1.bf16.msra.mxu0 0
  %644 = vmatprep.subr.bf16.mxu0 0
  %645 = vmatpush1.bf16.msra.mxu0 0
  %646 = vmatprep.subr.bf16.mxu0 0
  %647 = vmatpush1.bf16.msra.mxu0 0
  %648 = vmatprep.subr.bf16.mxu0 0
  %649 = vmatpush1.bf16.msra.mxu0 0
  %650 = vmatprep.subr.bf16.mxu0 0
  %651 = vmatpush1.bf16.msra.mxu0 0
  %652 = vmatprep.subr.bf16.mxu0 0
  %653 = vmatpush1.bf16.msra.mxu0 0
  %654 = vmatprep.subr.bf16.mxu0 0
  %655 = vmatpush1.bf16.msra.mxu0 0
  %656 = vmatprep.subr.bf16.mxu0 0
  %657 = vmatpush1.bf16.msra.mxu0 0
  %658 = vmatprep.mubr.bf16.mxu0 0
  %659 = vmatmul.mubr.bf16.gmra.mrb[0].mxu0 %v584
  %v660 = vpop.f32.mrb[0].mxu0
  %v661 = vadd.f32 0.0, %v660
  %v662 = vpop.f32.mrb[0].mxu0
  %v663 = vadd.f32 0.0, %v662
  %v664 = vpop.f32.mrb[0].mxu0
  %v665 = vpop.f32.mrb[0].mxu0
  %666 = vdwg.mxu0
  %v667 = vadd.f32 %v580, %v620
  %v668 = vadd.f32 %v581, %v622
  %v669 = vadd.f32 %v582, %v661
  %v670 = vadd.f32 %v583, %v663
  %v671 = vxor.u32 %v667, 2147483648
  %v672 = vmul.f32 %v671, 1.442695
  %v673 = vpow.pop %v672
  %v674 = vadd.f32 %v673, 1.0
  %v675 = vrcp.pop %v674
  %v676 = vmul.f32 1.0, %v675
  %v677 = vxor.u32 %v668, 2147483648
  %v678 = vmul.f32 %v677, 1.442695
  %v679 = vpow.pop %v678
  %v680 = vadd.f32 %v679, 1.0
  %v681 = vrcp.pop %v680
  %v682 = vmul.f32 1.0, %v681
  %v683 = vtanh.pop %v669
  %v684 = vxor.u32 %v670, 2147483648
  %v685 = vmul.f32 %v684, 1.442695
  %v686 = vpow.pop %v685
  %v687 = vadd.f32 %v686, 1.0
  %v688 = vrcp.pop %v687
  %v689 = vmul.f32 1.0, %v688
  %v690 = vmul.f32 %v682, %v578
  %v691 = vmul.f32 %v676, %v683
  %v692 = vadd.f32 %v690, %v691
  %v693 = vtanh.pop %v692
  %v694 = vmul.f32 %v689, %v693
  %695 = vst [vmem:[#allocation2] sm:$0xff] %v694
  %696 = vst [vmem:[#allocation3] sm:$0xff] %v692
  %v697 = vpack.c.bf16 %v694, %v694
  %s698 = scalar_lea.vmem %s2, 12
  %699 = vst [vmem:[%s698] sm:$0xf] %v697
  %v700 = vld [vmem:[#allocation2] sm:$0xff]
  %v701 = vld [vmem:[#allocation3] sm:$0xff]
  %s702 = scalar_lea.vmem %s0, 128
  %v703 = vld [vmem:[%s702] sm:$0xff]
  %v704 = vld [vmem:[%s702 + $0x8] sm:$0xff]
  %v705 = vld [vmem:[%s702 + $0x10] sm:$0xff]
  %v706 = vld [vmem:[%s702 + $0x18] sm:$0xff]
  %v707 = vpack.c.bf16 %v700, %v700
  %708 = vmatprep.subr.bf16.mxu0 %v154
  %709 = vmatpush1.bf16.msra.mxu0 %v153
  %710 = vmatprep.subr.bf16.mxu0 %v158
  %711 = vmatpush1.bf16.msra.mxu0 %v157
  %712 = vmatprep.subr.bf16.mxu0 %v162
  %713 = vmatpush1.bf16.msra.mxu0 %v161
  %714 = vmatprep.subr.bf16.mxu0 %v166
  %715 = vmatpush1.bf16.msra.mxu0 %v165
  %716 = vmatprep.subr.bf16.mxu0 %v170
  %717 = vmatpush1.bf16.msra.mxu0 %v169
  %718 = vmatprep.subr.bf16.mxu0 %v174
  %719 = vmatpush1.bf16.msra.mxu0 %v173
  %720 = vmatprep.subr.bf16.mxu0 %v178
  %721 = vmatpush1.bf16.msra.mxu0 %v177
  %722 = vmatprep.subr.bf16.mxu0 %v182
  %723 = vmatpush1.bf16.msra.mxu0 %v181
  %724 = vmatprep.subr.bf16.mxu0 0
  %725 = vmatpush1.bf16.msra.mxu0 0
  %726 = vmatprep.subr.bf16.mxu0 0
  %727 = vmatpush1.bf16.msra.mxu0 0
  %728 = vmatprep.subr.bf16.mxu0 0
  %729 = vmatpush1.bf16.msra.mxu0 0
  %730 = vmatprep.subr.bf16.mxu0 0
  %731 = vmatpush1.bf16.msra.mxu0 0
  %732 = vmatprep.subr.bf16.mxu0 0
  %733 = vmatpush1.bf16.msra.mxu0 0
  %734 = vmatprep.subr.bf16.mxu0 0
  %735 = vmatpush1.bf16.msra.mxu0 0
  %736 = vmatprep.subr.bf16.mxu0 0
  %737 = vmatpush1.bf16.msra.mxu0 0
  %738 = vmatprep.subr.bf16.mxu0 0
  %739 = vmatpush1.bf16.msra.mxu0 0
  %740 = vmatprep.mubr.bf16.mxu0 0
  %741 = vmatmul.mubr.bf16.gmra.mrb[0].mxu0 %v707
  %v742 = vpop.f32.mrb[0].mxu0
  %v743 = vadd.f32 0.0, %v742
  %v744 = vpop.f32.mrb[0].mxu0
  %v745 = vadd.f32 0.0, %v744
  %v746 = vpop.f32.mrb[0].mxu0
  %v747 = vpop.f32.mrb[0].mxu0
  %748 = vdwg.mxu0
  %749 = vmatprep.subr.bf16.mxu0 %v156
  %750 = vmatpush1.bf16.msra.mxu0 %v155
  %751 = vmatprep.subr.bf16.mxu0 %v160
  %752 = vmatpush1.bf16.msra.mxu0 %v159
  %753 = vmatprep.subr.bf16.mxu0 %v164
  %754 = vmatpush1.bf16.msra.mxu0 %v163
  %755 = vmatprep.subr.bf16.mxu0 %v168
  %756 = vmatpush1.bf16.msra.mxu0 %v167
  %757 = vmatprep.subr.bf16.mxu0 %v172
  %758 = vmatpush1.bf16.msra.mxu0 %v171
  %759 = vmatprep.subr.bf16.mxu0 %v176
  %760 = vmatpush1.bf16.msra.mxu0 %v175
  %761 = vmatprep.subr.bf16.mxu0 %v180
  %762 = vmatpush1.bf16.msra.mxu0 %v179
  %763 = vmatprep.subr.bf16.mxu0 %v184
  %764 = vmatpush1.bf16.msra.mxu0 %v183
  %765 = vmatprep.subr.bf16.mxu0 0
  %766 = vmatpush1.bf16.msra.mxu0 0
  %767 = vmatprep.subr.bf16.mxu0 0
  %768 = vmatpush1.bf16.msra.mxu0 0
  %769 = vmatprep.subr.bf16.mxu0 0
  %770 = vmatpush1.bf16.msra.mxu0 0
  %771 = vmatprep.subr.bf16.mxu0 0
  %772 = vmatpush1.bf16.msra.mxu0 0
  %773 = vmatprep.subr.bf16.mxu0 0
  %774 = vmatpush1.bf16.msra.mxu0 0
  %775 = vmatprep.subr.bf16.mxu0 0
  %776 = vmatpush1.bf16.msra.mxu0 0
  %777 = vmatprep.subr.bf16.mxu0 0
  %778 = vmatpush1.bf16.msra.mxu0 0
  %779 = vmatprep.subr.bf16.mxu0 0
  %780 = vmatpush1.bf16.msra.mxu0 0
  %781 = vmatprep.mubr.bf16.mxu0 0
  %782 = vmatmul.mubr.bf16.gmra.mrb[0].mxu0 %v707
  %v783 = vpop.f32.mrb[0].mxu0
  %v784 = vadd.f32 0.0, %v783
  %v785 = vpop.f32.mrb[0].mxu0
  %v786 = vadd.f32 0.0, %v785
  %v787 = vpop.f32.mrb[0].mxu0
  %v788 = vpop.f32.mrb[0].mxu0
  %789 = vdwg.mxu0
  %v790 = vadd.f32 %v703, %v743
  %v791 = vadd.f32 %v704, %v745
  %v792 = vadd.f32 %v705, %v784
  %v793 = vadd.f32 %v706, %v786
  %v794 = vxor.u32 %v790, 2147483648
  %v795 = vmul.f32 %v794, 1.442695
  %v796 = vpow.pop %v795
  %v797 = vadd.f32 %v796, 1.0
  %v798 = vrcp.pop %v797
  %v799 = vmul.f32 1.0, %v798
  %v800 = vxor.u32 %v791, 2147483648
  %v801 = vmul.f32 %v800, 1.442695
  %v802 = vpow.pop %v801
  %v803 = vadd.f32 %v802, 1.0
  %v804 = vrcp.pop %v803
  %v805 = vmul.f32 1.0, %v804
  %v806 = vtanh.pop %v792
  %v807 = vxor.u32 %v793, 2147483648
  %v808 = vmul.f32 %v807, 1.442695
  %v809 = vpow.pop %v808
  %v810 = vadd.f32 %v809, 1.0
  %v811 = vrcp.pop %v810
  %v812 = vmul.f32 1.0, %v811
  %v813 = vmul.f32 %v805, %v701
  %v814 = vmul.f32 %v799, %v806
  %v815 = vadd.f32 %v813, %v814
  %v816 = vtanh.pop %v815
  %v817 = vmul.f32 %v812, %v816
  %818 = vst [vmem:[#allocation2] sm:$0xff] %v817
  %819 = vst [vmem:[#allocation3] sm:$0xff] %v815
  %v820 = vpack.c.bf16 %v817, %v817
  %s821 = scalar_lea.vmem %s2, 16
  %822 = vst [vmem:[%s821] sm:$0xf] %v820
  %v823 = vld [vmem:[#allocation2] sm:$0xff]
  %v824 = vld [vmem:[#allocation3] sm:$0xff]
  %s825 = scalar_lea.vmem %s0, 160
  %v826 = vld [vmem:[%s825] sm:$0xff]
  %v827 = vld [vmem:[%s825 + $0x8] sm:$0xff]
  %v828 = vld [vmem:[%s825 + $0x10] sm:$0xff]
  %v829 = vld [vmem:[%s825 + $0x18] sm:$0xff]
  %v830 = vpack.c.bf16 %v823, %v823
  %831 = vmatprep.subr.bf16.mxu0 %v154
  %832 = vmatpush1.bf16.msra.mxu0 %v153
  %833 = vmatprep.subr.bf16.mxu0 %v158
  %834 = vmatpush1.bf16.msra.mxu0 %v157
  %835 = vmatprep.subr.bf16.mxu0 %v162
  %836 = vmatpush1.bf16.msra.mxu0 %v161
  %837 = vmatprep.subr.bf16.mxu0 %v166
  %838 = vmatpush1.bf16.msra.mxu0 %v165
  %839 = vmatprep.subr.bf16.mxu0 %v170
  %840 = vmatpush1.bf16.msra.mxu0 %v169
  %841 = vmatprep.subr.bf16.mxu0 %v174
  %842 = vmatpush1.bf16.msra.mxu0 %v173
  %843 = vmatprep.subr.bf16.mxu0 %v178
  %844 = vmatpush1.bf16.msra.mxu0 %v177
  %845 = vmatprep.subr.bf16.mxu0 %v182
  %846 = vmatpush1.bf16.msra.mxu0 %v181
  %847 = vmatprep.subr.bf16.mxu0 0
  %848 = vmatpush1.bf16.msra.mxu0 0
  %849 = vmatprep.subr.bf16.mxu0 0
  %850 = vmatpush1.bf16.msra.mxu0 0
  %851 = vmatprep.subr.bf16.mxu0 0
  %852 = vmatpush1.bf16.msra.mxu0 0
  %853 = vmatprep.subr.bf16.mxu0 0
  %854 = vmatpush1.bf16.msra.mxu0 0
  %855 = vmatprep.subr.bf16.mxu0 0
  %856 = vmatpush1.bf16.msra.mxu0 0
  %857 = vmatprep.subr.bf16.mxu0 0
  %858 = vmatpush1.bf16.msra.mxu0 0
  %859 = vmatprep.subr.bf16.mxu0 0
  %860 = vmatpush1.bf16.msra.mxu0 0
  %861 = vmatprep.subr.bf16.mxu0 0
  %862 = vmatpush1.bf16.msra.mxu0 0
  %863 = vmatprep.mubr.bf16.mxu0 0
  %864 = vmatmul.mubr.bf16.gmra.mrb[0].mxu0 %v830
  %v865 = vpop.f32.mrb[0].mxu0
  %v866 = vadd.f32 0.0, %v865
  %v867 = vpop.f32.mrb[0].mxu0
  %v868 = vadd.f32 0.0, %v867
  %v869 = vpop.f32.mrb[0].mxu0
  %v870 = vpop.f32.mrb[0].mxu0
  %871 = vdwg.mxu0
  %872 = vmatprep.subr.bf16.mxu0 %v156
  %873 = vmatpush1.bf16.msra.mxu0 %v155
  %874 = vmatprep.subr.bf16.mxu0 %v160
  %875 = vmatpush1.bf16.msra.mxu0 %v159
  %876 = vmatprep.subr.bf16.mxu0 %v164
  %877 = vmatpush1.bf16.msra.mxu0 %v163
  %878 = vmatprep.subr.bf16.mxu0 %v168
  %879 = vmatpush1.bf16.msra.mxu0 %v167
  %880 = vmatprep.subr.bf16.mxu0 %v172
  %881 = vmatpush1.bf16.msra.mxu0 %v171
  %882 = vmatprep.subr.bf16.mxu0 %v176
  %883 = vmatpush1.bf16.msra.mxu0 %v175
  %884 = vmatprep.subr.bf16.mxu0 %v180
  %885 = vmatpush1.bf16.msra.mxu0 %v179
  %886 = vmatprep.subr.bf16.mxu0 %v184
  %887 = vmatpush1.bf16.msra.mxu0 %v183
  %888 = vmatprep.subr.bf16.mxu0 0
  %889 = vmatpush1.bf16.msra.mxu0 0
  %890 = vmatprep.subr.bf16.mxu0 0
  %891 = vmatpush1.bf16.msra.mxu0 0
  %892 = vmatprep.subr.bf16.mxu0 0
  %893 = vmatpush1.bf16.msra.mxu0 0
  %894 = vmatprep.subr.bf16.mxu0 0
  %895 = vmatpush1.bf16.msra.mxu0 0
  %896 = vmatprep.subr.bf16.mxu0 0
  %897 = vmatpush1.bf16.msra.mxu0 0
  %898 = vmatprep.subr.bf16.mxu0 0
  %899 = vmatpush1.bf16.msra.mxu0 0
  %900 = vmatprep.subr.bf16.mxu0 0
  %901 = vmatpush1.bf16.msra.mxu0 0
  %902 = vmatprep.subr.bf16.mxu0 0
  %903 = vmatpush1.bf16.msra.mxu0 0
  %904 = vmatprep.mubr.bf16.mxu0 0
  %905 = vmatmul.mubr.bf16.gmra.mrb[0].mxu0 %v830
  %v906 = vpop.f32.mrb[0].mxu0
  %v907 = vadd.f32 0.0, %v906
  %v908 = vpop.f32.mrb[0].mxu0
  %v909 = vadd.f32 0.0, %v908
  %v910 = vpop.f32.mrb[0].mxu0
  %v911 = vpop.f32.mrb[0].mxu0
  %912 = vdwg.mxu0
  %v913 = vadd.f32 %v826, %v866
  %v914 = vadd.f32 %v827, %v868
  %v915 = vadd.f32 %v828, %v907
  %v916 = vadd.f32 %v829, %v909
  %v917 = vxor.u32 %v913, 2147483648
  %v918 = vmul.f32 %v917, 1.442695
  %v919 = vpow.pop %v918
  %v920 = vadd.f32 %v919, 1.0
  %v921 = vrcp.pop %v920
  %v922 = vmul.f32 1.0, %v921
  %v923 = vxor.u32 %v914, 2147483648
  %v924 = vmul.f32 %v923, 1.442695
  %v925 = vpow.pop %v924
  %v926 = vadd.f32 %v925, 1.0
  %v927 = vrcp.pop %v926
  %v928 = vmul.f32 1.0, %v927
  %v929 = vtanh.pop %v915
  %v930 = vxor.u32 %v916, 2147483648
  %v931 = vmul.f32 %v930, 1.442695
  %v932 = vpow.pop %v931
  %v933 = vadd.f32 %v932, 1.0
  %v934 = vrcp.pop %v933
  %v935 = vmul.f32 1.0, %v934
  %v936 = vmul.f32 %v928, %v824
  %v937 = vmul.f32 %v922, %v929
  %v938 = vadd.f32 %v936, %v937
  %v939 = vtanh.pop %v938
  %v940 = vmul.f32 %v935, %v939
  %941 = vst [vmem:[#allocation2] sm:$0xff] %v940
  %942 = vst [vmem:[#allocation3] sm:$0xff] %v938
  %v943 = vpack.c.bf16 %v940, %v940
  %s944 = scalar_lea.vmem %s2, 20
  %945 = vst [vmem:[%s944] sm:$0xf] %v943
  %v946 = vld [vmem:[#allocation2] sm:$0xff]
  %v947 = vld [vmem:[#allocation3] sm:$0xff]
  %s948 = scalar_lea.vmem %s0, 192
  %v949 = vld [vmem:[%s948] sm:$0xff]
  %v950 = vld [vmem:[%s948 + $0x8] sm:$0xff]
  %v951 = vld [vmem:[%s948 + $0x10] sm:$0xff]
  %v952 = vld [vmem:[%s948 + $0x18] sm:$0xff]
  %v953 = vpack.c.bf16 %v946, %v946
  %954 = vmatprep.subr.bf16.mxu0 %v154
  %955 = vmatpush1.bf16.msra.mxu0 %v153
  %956 = vmatprep.subr.bf16.mxu0 %v158
  %957 = vmatpush1.bf16.msra.mxu0 %v157
  %958 = vmatprep.subr.bf16.mxu0 %v162
  %959 = vmatpush1.bf16.msra.mxu0 %v161
  %960 = vmatprep.subr.bf16.mxu0 %v166
  %961 = vmatpush1.bf16.msra.mxu0 %v165
  %962 = vmatprep.subr.bf16.mxu0 %v170
  %963 = vmatpush1.bf16.msra.mxu0 %v169
  %964 = vmatprep.subr.bf16.mxu0 %v174
  %965 = vmatpush1.bf16.msra.mxu0 %v173
  %966 = vmatprep.subr.bf16.mxu0 %v178
  %967 = vmatpush1.bf16.msra.mxu0 %v177
  %968 = vmatprep.subr.bf16.mxu0 %v182
  %969 = vmatpush1.bf16.msra.mxu0 %v181
  %970 = vmatprep.subr.bf16.mxu0 0
  %971 = vmatpush1.bf16.msra.mxu0 0
  %972 = vmatprep.subr.bf16.mxu0 0
  %973 = vmatpush1.bf16.msra.mxu0 0
  %974 = vmatprep.subr.bf16.mxu0 0
  %975 = vmatpush1.bf16.msra.mxu0 0
  %976 = vmatprep.subr.bf16.mxu0 0
  %977 = vmatpush1.bf16.msra.mxu0 0
  %978 = vmatprep.subr.bf16.mxu0 0
  %979 = vmatpush1.bf16.msra.mxu0 0
  %980 = vmatprep.subr.bf16.mxu0 0
  %981 = vmatpush1.bf16.msra.mxu0 0
  %982 = vmatprep.subr.bf16.mxu0 0
  %983 = vmatpush1.bf16.msra.mxu0 0
  %984 = vmatprep.subr.bf16.mxu0 0
  %985 = vmatpush1.bf16.msra.mxu0 0
  %986 = vmatprep.mubr.bf16.mxu0 0
  %987 = vmatmul.mubr.bf16.gmra.mrb[0].mxu0 %v953
  %v988 = vpop.f32.mrb[0].mxu0
  %v989 = vadd.f32 0.0, %v988
  %v990 = vpop.f32.mrb[0].mxu0
  %v991 = vadd.f32 0.0, %v990
  %v992 = vpop.f32.mrb[0].mxu0
  %v993 = vpop.f32.mrb[0].mxu0
  %994 = vdwg.mxu0
  %995 = vmatprep.subr.bf16.mxu0 %v156
  %996 = vmatpush1.bf16.msra.mxu0 %v155
  %997 = vmatprep.subr.bf16.mxu0 %v160
  %998 = vmatpush1.bf16.msra.mxu0 %v159
  %999 = vmatprep.subr.bf16.mxu0 %v164
  %1000 = vmatpush1.bf16.msra.mxu0 %v163
  %1001 = vmatprep.subr.bf16.mxu0 %v168
  %1002 = vmatpush1.bf16.msra.mxu0 %v167
  %1003 = vmatprep.subr.bf16.mxu0 %v172
  %1004 = vmatpush1.bf16.msra.mxu0 %v171
  %1005 = vmatprep.subr.bf16.mxu0 %v176
  %1006 = vmatpush1.bf16.msra.mxu0 %v175
  %1007 = vmatprep.subr.bf16.mxu0 %v180
  %1008 = vmatpush1.bf16.msra.mxu0 %v179
  %1009 = vmatprep.subr.bf16.mxu0 %v184
  %1010 = vmatpush1.bf16.msra.mxu0 %v183
  %1011 = vmatprep.subr.bf16.mxu0 0
  %1012 = vmatpush1.bf16.msra.mxu0 0
  %1013 = vmatprep.subr.bf16.mxu0 0
  %1014 = vmatpush1.bf16.msra.mxu0 0
  %1015 = vmatprep.subr.bf16.mxu0 0
  %1016 = vmatpush1.bf16.msra.mxu0 0
  %1017 = vmatprep.subr.bf16.mxu0 0
  %1018 = vmatpush1.bf16.msra.mxu0 0
  %1019 = vmatprep.subr.bf16.mxu0 0
  %1020 = vmatpush1.bf16.msra.mxu0 0
  %1021 = vmatprep.subr.bf16.mxu0 0
  %1022 = vmatpush1.bf16.msra.mxu0 0
  %1023 = vmatprep.subr.bf16.mxu0 0
  %1024 = vmatpush1.bf16.msra.mxu0 0
  %1025 = vmatprep.subr.bf16.mxu0 0
  %1026 = vmatpush1.bf16.msra.mxu0 0
  %1027 = vmatprep.mubr.bf16.mxu0 0
  %1028 = vmatmul.mubr.bf16.gmra.mrb[0].mxu0 %v953
  %v1029 = vpop.f32.mrb[0].mxu0
  %v1030 = vadd.f32 0.0, %v1029
  %v1031 = vpop.f32.mrb[0].mxu0
  %v1032 = vadd.f32 0.0, %v1031
  %v1033 = vpop.f32.mrb[0].mxu0
  %v1034 = vpop.f32.mrb[0].mxu0
  %1035 = vdwg.mxu0
  %v1036 = vadd.f32 %v949, %v989
  %v1037 = vadd.f32 %v950, %v991
  %v1038 = vadd.f32 %v951, %v1030
  %v1039 = vadd.f32 %v952, %v1032
  %v1040 = vxor.u32 %v1036, 2147483648
  %v1041 = vmul.f32 %v1040, 1.442695
  %v1042 = vpow.pop %v1041
  %v1043 = vadd.f32 %v1042, 1.0
  %v1044 = vrcp.pop %v1043
  %v1045 = vmul.f32 1.0, %v1044
  %v1046 = vxor.u32 %v1037, 2147483648
  %v1047 = vmul.f32 %v1046, 1.442695
  %v1048 = vpow.pop %v1047
  %v1049 = vadd.f32 %v1048, 1.0
  %v1050 = vrcp.pop %v1049
  %v1051 = vmul.f32 1.0, %v1050
  %v1052 = vtanh.pop %v1038
  %v1053 = vxor.u32 %v1039, 2147483648
  %v1054 = vmul.f32 %v1053, 1.442695
  %v1055 = vpow.pop %v1054
  %v1056 = vadd.f32 %v1055, 1.0
  %v1057 = vrcp.pop %v1056
  %v1058 = vmul.f32 1.0, %v1057
  %v1059 = vmul.f32 %v1051, %v947
  %v1060 = vmul.f32 %v1045, %v1052
  %v1061 = vadd.f32 %v1059, %v1060
  %v1062 = vtanh.pop %v1061
  %v1063 = vmul.f32 %v1058, %v1062
  %1064 = vst [vmem:[#allocation2] sm:$0xff] %v1063
  %1065 = vst [vmem:[#allocation3] sm:$0xff] %v1061
  %v1066 = vpack.c.bf16 %v1063, %v1063
  %s1067 = scalar_lea.vmem %s2, 24
  %1068 = vst [vmem:[%s1067] sm:$0xf] %v1066
  %v1069 = vld [vmem:[#allocation2] sm:$0xff]
  %v1070 = vld [vmem:[#allocation3] sm:$0xff]
  %s1071 = scalar_lea.vmem %s0, 224
  %v1072 = vld [vmem:[%s1071] sm:$0xff]
  %v1073 = vld [vmem:[%s1071 + $0x8] sm:$0xff]
  %v1074 = vld [vmem:[%s1071 + $0x10] sm:$0xff]
  %v1075 = vld [vmem:[%s1071 + $0x18] sm:$0xff]
  %v1076 = vpack.c.bf16 %v1069, %v1069
  %1077 = vmatprep.subr.bf16.mxu0 %v154
  %1078 = vmatpush1.bf16.msra.mxu0 %v153
  %1079 = vmatprep.subr.bf16.mxu0 %v158
  %1080 = vmatpush1.bf16.msra.mxu0 %v157
  %1081 = vmatprep.subr.bf16.mxu0 %v162
  %1082 = vmatpush1.bf16.msra.mxu0 %v161
  %1083 = vmatprep.subr.bf16.mxu0 %v166
  %1084 = vmatpush1.bf16.msra.mxu0 %v165
  %1085 = vmatprep.subr.bf16.mxu0 %v170
  %1086 = vmatpush1.bf16.msra.mxu0 %v169
  %1087 = vmatprep.subr.bf16.mxu0 %v174
  %1088 = vmatpush1.bf16.msra.mxu0 %v173
  %1089 = vmatprep.subr.bf16.mxu0 %v178
  %1090 = vmatpush1.bf16.msra.mxu0 %v177
  %1091 = vmatprep.subr.bf16.mxu0 %v182
  %1092 = vmatpush1.bf16.msra.mxu0 %v181
  %1093 = vmatprep.subr.bf16.mxu0 0
  %1094 = vmatpush1.bf16.msra.mxu0 0
  %1095 = vmatprep.subr.bf16.mxu0 0
  %1096 = vmatpush1.bf16.msra.mxu0 0
  %1097 = vmatprep.subr.bf16.mxu0 0
  %1098 = vmatpush1.bf16.msra.mxu0 0
  %1099 = vmatprep.subr.bf16.mxu0 0
  %1100 = vmatpush1.bf16.msra.mxu0 0
  %1101 = vmatprep.subr.bf16.mxu0 0
  %1102 = vmatpush1.bf16.msra.mxu0 0
  %1103 = vmatprep.subr.bf16.mxu0 0
  %1104 = vmatpush1.bf16.msra.mxu0 0
  %1105 = vmatprep.subr.bf16.mxu0 0
  %1106 = vmatpush1.bf16.msra.mxu0 0
  %1107 = vmatprep.subr.bf16.mxu0 0
  %1108 = vmatpush1.bf16.msra.mxu0 0
  %1109 = vmatprep.mubr.bf16.mxu0 0
  %1110 = vmatmul.mubr.bf16.gmra.mrb[0].mxu0 %v1076
  %v1111 = vpop.f32.mrb[0].mxu0
  %v1112 = vadd.f32 0.0, %v1111
  %v1113 = vpop.f32.mrb[0].mxu0
  %v1114 = vadd.f32 0.0, %v1113
  %v1115 = vpop.f32.mrb[0].mxu0
  %v1116 = vpop.f32.mrb[0].mxu0
  %1117 = vdwg.mxu0
  %1118 = vmatprep.subr.bf16.mxu0 %v156
  %1119 = vmatpush1.bf16.msra.mxu0 %v155
  %1120 = vmatprep.subr.bf16.mxu0 %v160
  %1121 = vmatpush1.bf16.msra.mxu0 %v159
  %1122 = vmatprep.subr.bf16.mxu0 %v164
  %1123 = vmatpush1.bf16.msra.mxu0 %v163
  %1124 = vmatprep.subr.bf16.mxu0 %v168
  %1125 = vmatpush1.bf16.msra.mxu0 %v167
  %1126 = vmatprep.subr.bf16.mxu0 %v172
  %1127 = vmatpush1.bf16.msra.mxu0 %v171
  %1128 = vmatprep.subr.bf16.mxu0 %v176
  %1129 = vmatpush1.bf16.msra.mxu0 %v175
  %1130 = vmatprep.subr.bf16.mxu0 %v180
  %1131 = vmatpush1.bf16.msra.mxu0 %v179
  %1132 = vmatprep.subr.bf16.mxu0 %v184
  %1133 = vmatpush1.bf16.msra.mxu0 %v183
  %1134 = vmatprep.subr.bf16.mxu0 0
  %1135 = vmatpush1.bf16.msra.mxu0 0
  %1136 = vmatprep.subr.bf16.mxu0 0
  %1137 = vmatpush1.bf16.msra.mxu0 0
  %1138 = vmatprep.subr.bf16.mxu0 0
  %1139 = vmatpush1.bf16.msra.mxu0 0
  %1140 = vmatprep.subr.bf16.mxu0 0
  %1141 = vmatpush1.bf16.msra.mxu0 0
  %1142 = vmatprep.subr.bf16.mxu0 0
  %1143 = vmatpush1.bf16.msra.mxu0 0
  %1144 = vmatprep.subr.bf16.mxu0 0
  %1145 = vmatpush1.bf16.msra.mxu0 0
  %1146 = vmatprep.subr.bf16.mxu0 0
  %1147 = vmatpush1.bf16.msra.mxu0 0
  %1148 = vmatprep.subr.bf16.mxu0 0
  %1149 = vmatpush1.bf16.msra.mxu0 0
  %1150 = vmatprep.mubr.bf16.mxu0 0
  %1151 = vmatmul.mubr.bf16.gmra.mrb[0].mxu0 %v1076
  %v1152 = vpop.f32.mrb[0].mxu0
  %v1153 = vadd.f32 0.0, %v1152
  %v1154 = vpop.f32.mrb[0].mxu0
  %v1155 = vadd.f32 0.0, %v1154
  %v1156 = vpop.f32.mrb[0].mxu0
  %v1157 = vpop.f32.mrb[0].mxu0
  %1158 = vdwg.mxu0
  %v1159 = vadd.f32 %v1072, %v1112
  %v1160 = vadd.f32 %v1073, %v1114
  %v1161 = vadd.f32 %v1074, %v1153
  %v1162 = vadd.f32 %v1075, %v1155
  %v1163 = vxor.u32 %v1159, 2147483648
  %v1164 = vmul.f32 %v1163, 1.442695
  %v1165 = vpow.pop %v1164
  %v1166 = vadd.f32 %v1165, 1.0
  %v1167 = vrcp.pop %v1166
  %v1168 = vmul.f32 1.0, %v1167
  %v1169 = vxor.u32 %v1160, 2147483648
  %v1170 = vmul.f32 %v1169, 1.442695
  %v1171 = vpow.pop %v1170
  %v1172 = vadd.f32 %v1171, 1.0
  %v1173 = vrcp.pop %v1172
  %v1174 = vmul.f32 1.0, %v1173
  %v1175 = vtanh.pop %v1161
  %v1176 = vxor.u32 %v1162, 2147483648
  %v1177 = vmul.f32 %v1176, 1.442695
  %v1178 = vpow.pop %v1177
  %v1179 = vadd.f32 %v1178, 1.0
  %v1180 = vrcp.pop %v1179
  %v1181 = vmul.f32 1.0, %v1180
  %v1182 = vmul.f32 %v1174, %v1070
  %v1183 = vmul.f32 %v1168, %v1175
  %v1184 = vadd.f32 %v1182, %v1183
  %v1185 = vtanh.pop %v1184
  %v1186 = vmul.f32 %v1181, %v1185
  %1187 = vst [vmem:[#allocation2] sm:$0xff] %v1186
  %1188 = vst [vmem:[#allocation3] sm:$0xff] %v1184
  %v1189 = vpack.c.bf16 %v1186, %v1186
  %s1190 = scalar_lea.vmem %s2, 28
  %1191 = vst [vmem:[%s1190] sm:$0xf] %v1189
  // Predicated region
  $region14: #{decoder_rnn_forward.4} parent=0 // pred_check
    _
  $region15: #{decoder_rnn_forward.4} parent=0 // pred_check_branch
    %1193 = sbr.rel (0) target = $region17
  $region16: #{decoder_rnn_forward.4} parent=0 // pred_region
    _
  $region17: #{decoder_rnn_forward.4} parent=0 // pred_fallthru
    _
  // Predicated region
  $region18: #{decoder_rnn_forward.4} parent=0 // pred_check
    _
  $region19: #{decoder_rnn_forward.4} parent=0 // pred_check_branch
    %1195 = sbr.rel (0) target = $region21
  $region20: #{decoder_rnn_forward.4} parent=0 // pred_region
    _
  $region21: #{decoder_rnn_forward.4} parent=0 // pred_fallthru
    _

</llo_original>
